<compile_context>
chip_gen: v5e
topology: v5e:2x2
jax: 0.10.0
libtpu: 0.0.40
codegen_flags: <defaults>
</compile_context>

<pallas_src>
import jax
import jax.numpy as jnp
from jax import lax
from jax.experimental import pallas as pl
from jax.experimental.pallas import tpu as pltpu

EPS = 1e-5


# ---------------------------------------------------------------------------
# Pallas kernels
# ---------------------------------------------------------------------------
def _conv_stats_kernel(patches_ref, w_ref, ssum_ref, ssq_ref):
    """Pass 1: y = patches @ w ; accumulate per-channel sum and sum(y*y)."""
    y = jnp.dot(patches_ref[...], w_ref[...], preferred_element_type=jnp.float32)

    @pl.when(pl.program_id(0) == 0)
    def _():
        ssum_ref[...] = jnp.zeros_like(ssum_ref)
        ssq_ref[...] = jnp.zeros_like(ssq_ref)

    ssum_ref[...] += jnp.sum(y, axis=0, keepdims=True)
    ssq_ref[...] += jnp.sum(y * y, axis=0, keepdims=True)


def _conv_apply_kernel(patches_ref, w_ref, scale_ref, shift_ref, out_ref):
    """Pass 2: out = relu((patches @ w) * scale + shift)."""
    y = jnp.dot(patches_ref[...], w_ref[...], preferred_element_type=jnp.float32)
    out_ref[...] = jnp.maximum(y * scale_ref[...] + shift_ref[...], 0.0)


def _conv_apply_res_kernel(patches_ref, w_ref, scale_ref, shift_ref, res_ref, out_ref):
    """Pass 2 + residual: out = relu((patches @ w) * scale + shift + res)."""
    y = jnp.dot(patches_ref[...], w_ref[...], preferred_element_type=jnp.float32)
    out_ref[...] = jnp.maximum(y * scale_ref[...] + shift_ref[...] + res_ref[...], 0.0)


# ---------------------------------------------------------------------------
# Glue: im2col (NHWC) + padding + pallas_call wrappers
# ---------------------------------------------------------------------------
def _round_up(x, m):
    return ((x + m - 1) // m) * m


def _choose_tm(m):
    # Big row tiles amortize per-step overhead and keep the MXU / DMA pipeline
    # full; sized so double-buffered tiles stay well inside scoped VMEM on
    # v5e (16 MiB default) / v6e (32 MiB) / v7x (64 MiB physical).
    for tm in (1024, 512, 256, 128):
        if m >= 2 * tm:
            return tm
    return 128


def _im2col_nhwc(x_nhwc, stride):
    """3x3 / pad=1 patch extraction from NHWC.  K index = (kh*3+kw)*C + c."""
    N, H, W, C = x_nhwc.shape
    Ho = (H + 2 - 3) // stride + 1
    Wo = (W + 2 - 3) // stride + 1
    xp = jnp.pad(x_nhwc, ((0, 0), (1, 1), (1, 1), (0, 0)))
    cols = []
    for kh in range(3):
        for kw in range(3):
            sl = xp[:, kh:kh + stride * (Ho - 1) + 1:stride,
                       kw:kw + stride * (Wo - 1) + 1:stride, :]   # (N, Ho, Wo, C)
            cols.append(sl)
    pat = jnp.concatenate(cols, axis=-1)                           # (N, Ho, Wo, 9*C)
    return pat.reshape(N * Ho * Wo, 9 * C), Ho, Wo


def _conv3x3_bn(x_nhwc, weight, gamma, beta, stride, residual_nhwc=None):
    """Fused conv3x3(pad=1) + BN(batch stats) [+ residual] + ReLU (NHWC in/out)."""
    N, H, W, Cin = x_nhwc.shape
    Cout = weight.shape[0]

    patches, Ho, Wo = _im2col_nhwc(x_nhwc, stride)
    M, K = patches.shape

    Kp = _round_up(K, 16)            # bf16 sublane pack only -- no 128 blowup
    Cp = _round_up(Cout, 128)        # lane-dense output channels
    TM = _choose_tm(M)
    Mp = _round_up(M, TM)
    grid = (Mp // TM,)

    # Zero-padded rows / K columns contribute exactly 0 to the matmul and to
    # the BN sums, so padding is numerically transparent.
    patches_p = jnp.pad(patches, ((0, Mp - M), (0, Kp - K))).astype(jnp.bfloat16)
    wmat = jnp.transpose(weight, (2, 3, 1, 0)).reshape(K, Cout)    # (K, Cout), K=(kh,kw,c)
    wmat_p = jnp.pad(wmat, ((0, Kp - K), (0, Cp - Cout))).astype(jnp.bfloat16)
    gamma_p = jnp.pad(gamma.astype(jnp.float32), (0, Cp - Cout))
    beta_p = jnp.pad(beta.astype(jnp.float32), (0, Cp - Cout))

    # Explicit scoped-VMEM budget: double-buffered tiles + resident operands,
    # with generous headroom (fits every generation's default easily here).
    vmem_bytes = (2 * TM * Kp * 2        # patches (bf16), double-buffered
                  + 2 * TM * Cp * 4      # output tile (f32), double-buffered
                  + 2 * TM * Cp * 4      # residual tile (f32), double-buffered
                  + Kp * Cp * 2          # resident weight (bf16)
                  + 8 * Cp * 4)          # scale/shift/stat vectors
    vmem_bytes = int(min(max(2 * vmem_bytes, 8 << 20), 64 << 20))

    patches_spec = pl.BlockSpec((TM, Kp), lambda i: (i, 0))
    weight_spec = pl.BlockSpec((Kp, Cp), lambda i: (0, 0))       # resident
    vec_spec = pl.BlockSpec((1, Cp), lambda i: (0, 0))           # resident

    # ---- pass 1: per-channel sum / sum-of-squares over all M rows ----------
    ssum, ssq = pl.pallas_call(
        _conv_stats_kernel,
        out_shape=(jax.ShapeDtypeStruct((1, Cp), jnp.float32),
                   jax.ShapeDtypeStruct((1, Cp), jnp.float32)),
        grid=grid,
        in_specs=[patches_spec, weight_spec],
        out_specs=(vec_spec, vec_spec),
        compiler_params=pltpu.CompilerParams(
            dimension_semantics=("arbitrary",),       # accumulator across M tiles
            vmem_limit_bytes=vmem_bytes),
    )(patches_p, wmat_p)

    # ---- fold BN into per-channel scale / shift (tiny (Cp,) math in f32) ----
    inv_m = jnp.float32(1.0 / M)                      # divide by REAL row count
    mean = ssum[0] * inv_m
    var = jnp.maximum(ssq[0] * inv_m - mean * mean, 0.0)
    scale = gamma_p * lax.rsqrt(var + EPS)
    shift = beta_p - mean * scale
    scale = scale.reshape(1, Cp)
    shift = shift.reshape(1, Cp)

    # ---- pass 2: apply scale/shift (+ residual) + ReLU ----------------------
    in_specs = [patches_spec, weight_spec, vec_spec, vec_spec]
    args = [patches_p, wmat_p, scale, shift]
    if residual_nhwc is None:
        kernel = _conv_apply_kernel
    else:
        res = residual_nhwc.reshape(M, Cout).astype(jnp.float32)
        res_p = jnp.pad(res, ((0, Mp - M), (0, Cp - Cout)))
        in_specs.append(pl.BlockSpec((TM, Cp), lambda i: (i, 0)))
        args.append(res_p)
        kernel = _conv_apply_res_kernel

    out = pl.pallas_call(
        kernel,
        out_shape=jax.ShapeDtypeStruct((Mp, Cp), jnp.float32),
        grid=grid,
        in_specs=in_specs,
        out_specs=pl.BlockSpec((TM, Cp), lambda i: (i, 0)),
        compiler_params=pltpu.CompilerParams(
            dimension_semantics=("parallel",),        # independent tiles (v7x 2 TCs)
            vmem_limit_bytes=vmem_bytes),
    )(*args)

    return out[:M, :Cout].reshape(N, Ho, Wo, Cout)


def basic_block_forward(x_nchw, params, stride=1, option="A"):
    """Pallas implementation of BasicBlock.forward (training-mode BN). NCHW API."""
    w1, g1, b1, w2, g2, b2 = params
    in_planes = x_nchw.shape[1]
    planes = w1.shape[0]

    x = jnp.transpose(x_nchw, (0, 2, 3, 1))                       # NHWC, once at entry

    out = _conv3x3_bn(x, w1, g1, b1, stride)                      # relu(bn1(conv1(x)))

    if stride != 1 or in_planes != planes:
        if option == "A":
            sc = x[:, ::2, ::2, :]
            pad_c = planes // 4
            sc = jnp.pad(sc, ((0, 0), (0, 0), (0, 0), (pad_c, pad_c)))
        else:
            # TODO(synk): option 'B' (1x1 conv + BN shortcut) not instantiated here.
            raise NotImplementedError("option B not configured in this script")
    else:
        sc = x

    out = _conv3x3_bn(out, w2, g2, b2, 1, residual_nhwc=sc)       # relu(bn2(conv2)+sc)
    return jnp.transpose(out, (0, 3, 1, 2))                       # NCHW, once at exit


# ---------------------------------------------------------------------------
# Pure-JAX reference (mirrors the PyTorch forward, training-mode BN, f32)
# ---------------------------------------------------------------------------
def _ref_forward(x, params, stride=1):
    w1, g1, b1, w2, g2, b2 = params
    in_planes = x.shape[1]
    planes = w1.shape[0]

    def conv(a, w, s):
        return lax.conv_general_dilated(
            a, w, (s, s), ((1, 1), (1, 1)),
            dimension_numbers=("NCHW", "OIHW", "NCHW"),
            precision=lax.Precision.HIGHEST)

    def bn(y, g, b):
        mean = jnp.mean(y, axis=(0, 2, 3), keepdims=True)
        var = jnp.mean((y - mean) ** 2, axis=(0, 2, 3), keepdims=True)
        return (y - mean) * lax.rsqrt(var + EPS) * g.reshape(1, -1, 1, 1) + b.reshape(1, -1, 1, 1)

    out = jax.nn.relu(bn(conv(x, w1, stride), g1, b1))
    out = bn(conv(out, w2, 1), g2, b2)
    if stride != 1 or in_planes != planes:
        sc = x[:, :, ::2, ::2]
        pad_c = planes // 4
        sc = jnp.pad(sc, ((0, 0), (pad_c, pad_c), (0, 0), (0, 0)))
    else:
        sc = x
    return jax.nn.relu(out + sc)


def _init_params(key, in_planes, planes):
    ks = jax.random.split(key, 6)
    w1 = jax.random.normal(ks[0], (planes, in_planes, 3, 3), jnp.float32) * 0.1
    g1 = 1.0 + 0.1 * jax.random.normal(ks[1], (planes,), jnp.float32)
    b1 = 0.1 * jax.random.normal(ks[2], (planes,), jnp.float32)
    w2 = jax.random.normal(ks[3], (planes, planes, 3, 3), jnp.float32) * 0.1
    g2 = 1.0 + 0.1 * jax.random.normal(ks[4], (planes,), jnp.float32)
    b2 = 0.1 * jax.random.normal(ks[5], (planes,), jnp.float32)
    return (w1, g1, b1, w2, g2, b2)


if __name__ == "__main__":
    root = jax.random.PRNGKey(0)
    kx, kp1, kp2 = jax.random.split(root, 3)

    fwd = jax.jit(basic_block_forward, static_argnames=("stride", "option"))

    # Case 1: identity shortcut (in_planes == planes, stride == 1); M=512 -> grid of 2.
    x = jax.random.normal(kx, (2, 4, 16, 16), jnp.float32)
    params1 = _init_params(kp1, in_planes=4, planes=4)
    y = jax.block_until_ready(fwd(x, params1, stride=1))
    y_ref = _ref_forward(x, params1, stride=1)
    assert y.shape == (2, 4, 16, 16)
    # bf16 matmul operands (f32 accumulation) -> ~bf16-level tolerance vs f32 ref.
    assert jnp.allclose(y, y_ref, rtol=5e-2, atol=5e-2), "case1 mismatch"

    # Case 2: option-A downsampling shortcut (stride=2, planes = 2*in_planes).
    params2 = _init_params(kp2, in_planes=4, planes=8)
    y2 = jax.block_until_ready(fwd(x, params2, stride=2))
    y2_ref = _ref_forward(x, params2, stride=2)
    assert y2.shape == (2, 8, 8, 8)
    assert jnp.allclose(y2, y2_ref, rtol=5e-2, atol=5e-2), "case2 mismatch"

    print("KERNEL_OK")
</pallas_src>

<mosaic_0001>
module attributes {stable_mosaic.version = 11 : i64} {
  func.func @_conv_stats_kernel(%arg0: i32, %arg1: memref<256x48xbf16, #tpu.memory_space<vmem>>, %arg2: memref<48x128xbf16, #tpu.memory_space<vmem>>, %arg3: memref<1x128xf32, #tpu.memory_space<vmem>>, %arg4: memref<1x128xf32, #tpu.memory_space<vmem>>) attributes {dimension_semantics = [#tpu.dimension_semantics<arbitrary>], iteration_bounds = array<i64: 2>, scalar_prefetch = 0 : i64, scratch_operands = 0 : i64, tpu.core_type = #tpu.core_type<tc>, window_params = [{transform_indices = @transform_0, window_bounds = array<i64: 256, 48>}, {pipeline_mode = #tpu.pipeline_mode<synchronous>, transform_indices = @transform_1, window_bounds = array<i64: 48, 128>}, {pipeline_mode = #tpu.pipeline_mode<synchronous>, transform_indices = @transform_2, window_bounds = array<i64: 1, 128>}, {pipeline_mode = #tpu.pipeline_mode<synchronous>, transform_indices = @transform_3, window_bounds = array<i64: 1, 128>}]} {
    %c0 = arith.constant 0 : index
    %c0_0 = arith.constant 0 : index
    %0 = vector.load %arg1[%c0, %c0_0] : memref<256x48xbf16, #tpu.memory_space<vmem>>, vector<256x48xbf16>
    %c0_1 = arith.constant 0 : index
    %c0_2 = arith.constant 0 : index
    %1 = vector.load %arg2[%c0_1, %c0_2] : memref<48x128xbf16, #tpu.memory_space<vmem>>, vector<48x128xbf16>
    %cst = arith.constant dense<0.000000e+00> : vector<256x128xf32>
    %2 = tpu.matmul %0, %1, %cst {dimension_numbers = #tpu.dot_dimension_numbers<[1], [0], [0], [1], [0, 0, 1, 1], [], []>} : vector<256x48xbf16>, vector<48x128xbf16>, vector<256x128xf32> -> vector<256x128xf32>
    %c0_i32 = arith.constant 0 : i32
    %3 = arith.cmpi eq, %arg0, %c0_i32 : i32
    %4 = arith.extui %3 : i1 to i32
    %c0_i32_3 = arith.constant 0 : i32
    %5 = arith.cmpi ne, %4, %c0_i32_3 : i32
    scf.if %5 {
      %cst_14 = arith.constant 0.000000e+00 : f32
      %17 = vector.broadcast %cst_14 : f32 to vector<1x128xf32>
      %c0_15 = arith.constant 0 : index
      %c0_16 = arith.constant 0 : index
      %18 = vector.load %arg3[%c0_15, %c0_16] : memref<1x128xf32, #tpu.memory_space<vmem>>, vector<1x128xf32>
      tpu.vector_store %arg3[%c0_15, %c0_16], %17 {strides = array<i32>} : memref<1x128xf32, #tpu.memory_space<vmem>>, vector<1x128xf32>,
      %cst_17 = arith.constant 0.000000e+00 : f32
      %19 = vector.broadcast %cst_17 : f32 to vector<1x128xf32>
      %c0_18 = arith.constant 0 : index
      %c0_19 = arith.constant 0 : index
      %20 = vector.load %arg4[%c0_18, %c0_19] : memref<1x128xf32, #tpu.memory_space<vmem>>, vector<1x128xf32>
      tpu.vector_store %arg4[%c0_18, %c0_19], %19 {strides = array<i32>} : memref<1x128xf32, #tpu.memory_space<vmem>>, vector<1x128xf32>,
    } else {
    }
    %c0_4 = arith.constant 0 : index
    %c0_5 = arith.constant 0 : index
    %6 = vector.load %arg3[%c0_4, %c0_5] : memref<1x128xf32, #tpu.memory_space<vmem>>, vector<1x128xf32>
    %cst_6 = arith.constant dense<0.000000e+00> : vector<128xf32>
    %7 = vector.multi_reduction <add>, %2, %cst_6 [0] : vector<256x128xf32> to vector<128xf32>
    %8 = vector.shape_cast %7 : vector<128xf32> to vector<1x128xf32>
    %9 = arith.addf %6, %8 : vector<1x128xf32>
    %c0_7 = arith.constant 0 : index
    %c0_8 = arith.constant 0 : index
    %10 = vector.load %arg3[%c0_7, %c0_8] : memref<1x128xf32, #tpu.memory_space<vmem>>, vector<1x128xf32>
    tpu.vector_store %arg3[%c0_7, %c0_8], %9 {strides = array<i32>} : memref<1x128xf32, #tpu.memory_space<vmem>>, vector<1x128xf32>,
    %c0_9 = arith.constant 0 : index
    %c0_10 = arith.constant 0 : index
    %11 = vector.load %arg4[%c0_9, %c0_10] : memref<1x128xf32, #tpu.memory_space<vmem>>, vector<1x128xf32>
    %12 = arith.mulf %2, %2 : vector<256x128xf32>
    %cst_11 = arith.constant dense<0.000000e+00> : vector<128xf32>
    %13 = vector.multi_reduction <add>, %12, %cst_11 [0] : vector<256x128xf32> to vector<128xf32>
    %14 = vector.shape_cast %13 : vector<128xf32> to vector<1x128xf32>
    %15 = arith.addf %11, %14 : vector<1x128xf32>
    %c0_12 = arith.constant 0 : index
    %c0_13 = arith.constant 0 : index
    %16 = vector.load %arg4[%c0_12, %c0_13] : memref<1x128xf32, #tpu.memory_space<vmem>>, vector<1x128xf32>
    tpu.vector_store %arg4[%c0_12, %c0_13], %15 {strides = array<i32>} : memref<1x128xf32, #tpu.memory_space<vmem>>, vector<1x128xf32>,
    return
  }
  func.func @transform_0(%arg0: i32) -> (i32, i32) {
    %c0_i32 = arith.constant 0 : i32
    %c0_i32_0 = arith.constant 0 : i32
    return %arg0, %c0_i32 : i32, i32
  }
  func.func @transform_1(%arg0: i32) -> (i32, i32) {
    %c0_i32 = arith.constant 0 : i32
    %c0_i32_0 = arith.constant 0 : i32
    %c0_i32_1 = arith.constant 0 : i32
    return %c0_i32, %c0_i32_0 : i32, i32
  }
  func.func @transform_2(%arg0: i32) -> (i32, i32) {
    %c0_i32 = arith.constant 0 : i32
    %c0_i32_0 = arith.constant 0 : i32
    %c0_i32_1 = arith.constant 0 : i32
    return %c0_i32, %c0_i32_0 : i32, i32
  }
  func.func @transform_3(%arg0: i32) -> (i32, i32) {
    %c0_i32 = arith.constant 0 : i32
    %c0_i32_0 = arith.constant 0 : i32
    %c0_i32_1 = arith.constant 0 : i32
    return %c0_i32, %c0_i32_0 : i32, i32
  }
}

module attributes {stable_mosaic.version = 11 : i64} {
  func.func @_conv_apply_kernel(%arg0: i32, %arg1: memref<256x48xbf16, #tpu.memory_space<vmem>>, %arg2: memref<48x128xbf16, #tpu.memory_space<vmem>>, %arg3: memref<1x128xf32, #tpu.memory_space<vmem>>, %arg4: memref<1x128xf32, #tpu.memory_space<vmem>>, %arg5: memref<256x128xf32, #tpu.memory_space<vmem>>) attributes {dimension_semantics = [#tpu.dimension_semantics<parallel>], iteration_bounds = array<i64: 2>, scalar_prefetch = 0 : i64, scratch_operands = 0 : i64, tpu.core_type = #tpu.core_type<tc>, window_params = [{transform_indices = @transform_0, window_bounds = array<i64: 256, 48>}, {pipeline_mode = #tpu.pipeline_mode<synchronous>, transform_indices = @transform_1, window_bounds = array<i64: 48, 128>}, {pipeline_mode = #tpu.pipeline_mode<synchronous>, transform_indices = @transform_2, window_bounds = array<i64: 1, 128>}, {pipeline_mode = #tpu.pipeline_mode<synchronous>, transform_indices = @transform_3, window_bounds = array<i64: 1, 128>}, {transform_indices = @transform_4, window_bounds = array<i64: 256, 128>}]} {
    %c0 = arith.constant 0 : index
    %c0_0 = arith.constant 0 : index
    %0 = vector.load %arg1[%c0, %c0_0] : memref<256x48xbf16, #tpu.memory_space<vmem>>, vector<256x48xbf16>
    %c0_1 = arith.constant 0 : index
    %c0_2 = arith.constant 0 : index
    %1 = vector.load %arg2[%c0_1, %c0_2] : memref<48x128xbf16, #tpu.memory_space<vmem>>, vector<48x128xbf16>
    %cst = arith.constant dense<0.000000e+00> : vector<256x128xf32>
    %2 = tpu.matmul %0, %1, %cst {dimension_numbers = #tpu.dot_dimension_numbers<[1], [0], [0], [1], [0, 0, 1, 1], [], []>} : vector<256x48xbf16>, vector<48x128xbf16>, vector<256x128xf32> -> vector<256x128xf32>
    %c0_3 = arith.constant 0 : index
    %c0_4 = arith.constant 0 : index
    %3 = vector.load %arg3[%c0_3, %c0_4] : memref<1x128xf32, #tpu.memory_space<vmem>>, vector<1x128xf32>
    %4 = vector.broadcast %3 : vector<1x128xf32> to vector<256x128xf32>
    %5 = arith.mulf %2, %4 : vector<256x128xf32>
    %c0_5 = arith.constant 0 : index
    %c0_6 = arith.constant 0 : index
    %6 = vector.load %arg4[%c0_5, %c0_6] : memref<1x128xf32, #tpu.memory_space<vmem>>, vector<1x128xf32>
    %7 = vector.broadcast %6 : vector<1x128xf32> to vector<256x128xf32>
    %8 = arith.addf %5, %7 : vector<256x128xf32>
    %cst_7 = arith.constant 0.000000e+00 : f32
    %9 = vector.broadcast %cst_7 : f32 to vector<256x128xf32>
    %10 = arith.maximumf %8, %9 : vector<256x128xf32>
    %c0_8 = arith.constant 0 : index
    %c0_9 = arith.constant 0 : index
    %11 = vector.load %arg5[%c0_8, %c0_9] : memref<256x128xf32, #tpu.memory_space<vmem>>, vector<256x128xf32>
    tpu.vector_store %arg5[%c0_8, %c0_9], %10 {strides = array<i32>} : memref<256x128xf32, #tpu.memory_space<vmem>>, vector<256x128xf32>,
    return
  }
  func.func @transform_0(%arg0: i32) -> (i32, i32) {
    %c0_i32 = arith.constant 0 : i32
    %c0_i32_0 = arith.constant 0 : i32
    return %arg0, %c0_i32 : i32, i32
  }
  func.func @transform_1(%arg0: i32) -> (i32, i32) {
    %c0_i32 = arith.constant 0 : i32
    %c0_i32_0 = arith.constant 0 : i32
    %c0_i32_1 = arith.constant 0 : i32
    return %c0_i32, %c0_i32_0 : i32, i32
  }
  func.func @transform_2(%arg0: i32) -> (i32, i32) {
    %c0_i32 = arith.constant 0 : i32
    %c0_i32_0 = arith.constant 0 : i32
    %c0_i32_1 = arith.constant 0 : i32
    return %c0_i32, %c0_i32_0 : i32, i32
  }
  func.func @transform_3(%arg0: i32) -> (i32, i32) {
    %c0_i32 = arith.constant 0 : i32
    %c0_i32_0 = arith.constant 0 : i32
    %c0_i32_1 = arith.constant 0 : i32
    return %c0_i32, %c0_i32_0 : i32, i32
  }
  func.func @transform_4(%arg0: i32) -> (i32, i32) {
    %c0_i32 = arith.constant 0 : i32
    %c0_i32_0 = arith.constant 0 : i32
    return %arg0, %c0_i32 : i32, i32
  }
}

module attributes {stable_mosaic.version = 11 : i64} {
  func.func @_conv_apply_res_kernel(%arg0: i32, %arg1: memref<256x48xbf16, #tpu.memory_space<vmem>>, %arg2: memref<48x128xbf16, #tpu.memory_space<vmem>>, %arg3: memref<1x128xf32, #tpu.memory_space<vmem>>, %arg4: memref<1x128xf32, #tpu.memory_space<vmem>>, %arg5: memref<256x128xf32, #tpu.memory_space<vmem>>, %arg6: memref<256x128xf32, #tpu.memory_space<vmem>>) attributes {dimension_semantics = [#tpu.dimension_semantics<parallel>], iteration_bounds = array<i64: 2>, scalar_prefetch = 0 : i64, scratch_operands = 0 : i64, tpu.core_type = #tpu.core_type<tc>, window_params = [{transform_indices = @transform_0, window_bounds = array<i64: 256, 48>}, {pipeline_mode = #tpu.pipeline_mode<synchronous>, transform_indices = @transform_1, window_bounds = array<i64: 48, 128>}, {pipeline_mode = #tpu.pipeline_mode<synchronous>, transform_indices = @transform_2, window_bounds = array<i64: 1, 128>}, {pipeline_mode = #tpu.pipeline_mode<synchronous>, transform_indices = @transform_3, window_bounds = array<i64: 1, 128>}, {transform_indices = @transform_4, window_bounds = array<i64: 256, 128>}, {transform_indices = @transform_5, window_bounds = array<i64: 256, 128>}]} {
    %c0 = arith.constant 0 : index
    %c0_0 = arith.constant 0 : index
    %0 = vector.load %arg1[%c0, %c0_0] : memref<256x48xbf16, #tpu.memory_space<vmem>>, vector<256x48xbf16>
    %c0_1 = arith.constant 0 : index
    %c0_2 = arith.constant 0 : index
    %1 = vector.load %arg2[%c0_1, %c0_2] : memref<48x128xbf16, #tpu.memory_space<vmem>>, vector<48x128xbf16>
    %cst = arith.constant dense<0.000000e+00> : vector<256x128xf32>
    %2 = tpu.matmul %0, %1, %cst {dimension_numbers = #tpu.dot_dimension_numbers<[1], [0], [0], [1], [0, 0, 1, 1], [], []>} : vector<256x48xbf16>, vector<48x128xbf16>, vector<256x128xf32> -> vector<256x128xf32>
    %c0_3 = arith.constant 0 : index
    %c0_4 = arith.constant 0 : index
    %3 = vector.load %arg3[%c0_3, %c0_4] : memref<1x128xf32, #tpu.memory_space<vmem>>, vector<1x128xf32>
    %4 = vector.broadcast %3 : vector<1x128xf32> to vector<256x128xf32>
    %5 = arith.mulf %2, %4 : vector<256x128xf32>
    %c0_5 = arith.constant 0 : index
    %c0_6 = arith.constant 0 : index
    %6 = vector.load %arg4[%c0_5, %c0_6] : memref<1x128xf32, #tpu.memory_space<vmem>>, vector<1x128xf32>
    %7 = vector.broadcast %6 : vector<1x128xf32> to vector<256x128xf32>
    %8 = arith.addf %5, %7 : vector<256x128xf32>
    %c0_7 = arith.constant 0 : index
    %c0_8 = arith.constant 0 : index
    %9 = vector.load %arg5[%c0_7, %c0_8] : memref<256x128xf32, #tpu.memory_space<vmem>>, vector<256x128xf32>
    %10 = arith.addf %8, %9 : vector<256x128xf32>
    %cst_9 = arith.constant 0.000000e+00 : f32
    %11 = vector.broadcast %cst_9 : f32 to vector<256x128xf32>
    %12 = arith.maximumf %10, %11 : vector<256x128xf32>
    %c0_10 = arith.constant 0 : index
    %c0_11 = arith.constant 0 : index
    %13 = vector.load %arg6[%c0_10, %c0_11] : memref<256x128xf32, #tpu.memory_space<vmem>>, vector<256x128xf32>
    tpu.vector_store %arg6[%c0_10, %c0_11], %12 {strides = array<i32>} : memref<256x128xf32, #tpu.memory_space<vmem>>, vector<256x128xf32>,
    return
  }
  func.func @transform_0(%arg0: i32) -> (i32, i32) {
    %c0_i32 = arith.constant 0 : i32
    %c0_i32_0 = arith.constant 0 : i32
    return %arg0, %c0_i32 : i32, i32
  }
  func.func @transform_1(%arg0: i32) -> (i32, i32) {
    %c0_i32 = arith.constant 0 : i32
    %c0_i32_0 = arith.constant 0 : i32
    %c0_i32_1 = arith.constant 0 : i32
    return %c0_i32, %c0_i32_0 : i32, i32
  }
  func.func @transform_2(%arg0: i32) -> (i32, i32) {
    %c0_i32 = arith.constant 0 : i32
    %c0_i32_0 = arith.constant 0 : i32
    %c0_i32_1 = arith.constant 0 : i32
    return %c0_i32, %c0_i32_0 : i32, i32
  }
  func.func @transform_3(%arg0: i32) -> (i32, i32) {
    %c0_i32 = arith.constant 0 : i32
    %c0_i32_0 = arith.constant 0 : i32
    %c0_i32_1 = arith.constant 0 : i32
    return %c0_i32, %c0_i32_0 : i32, i32
  }
  func.func @transform_4(%arg0: i32) -> (i32, i32) {
    %c0_i32 = arith.constant 0 : i32
    %c0_i32_0 = arith.constant 0 : i32
    return %arg0, %c0_i32 : i32, i32
  }
  func.func @transform_5(%arg0: i32) -> (i32, i32) {
    %c0_i32 = arith.constant 0 : i32
    %c0_i32_0 = arith.constant 0 : i32
    return %arg0, %c0_i32 : i32, i32
  }
}

</mosaic_0001>

<llo_original>
// kernel: basic_block_forward.4
$region0: #{basic_block_forward.4}
  #allocation0 [shape = 'u32[]', space=smem, size = 0x4, offset = 0x4, fixed_abs, tag = 'smem constant byte address 0x4 - core index']
  #allocation1 [shape = 'u32[72,128]{1,0:T(1,128)}', space=vmem, size = 0x9000, scoped, tag = 'internal scratch']
  %s0 = inlined_call_operand.vmem [shape: bf16[512,48], index: 0, kind: input, shape index: {}]
  %s1 = inlined_call_operand.vmem [shape: bf16[48,128], index: 1, kind: input, shape index: {}]
  %s2 = inlined_call_operand.vmem [shape: f32[1,128], index: 2, kind: output, shape index: {0}]
  %s3 = inlined_call_operand.vmem [shape: f32[1,128], index: 3, kind: output, shape index: {1}]
  %4 = xla_tuple %s2, %s3
  %s5 = sld [smem:[#allocation0]]
  $region53: #{basic_block_forward.4} parent=0
    _
  %s7 = ssub.s32 1, %s5
  %s8 = scalar_select 0, %s7, %s5
  loop: start=0, step=1, limit=4
  $region2: #{basic_block_forward.4} parent=0 // loop_pre_header
    _
  $region3: #{basic_block_forward.4} parent=0 // loop_header
    %s10 = sphi 0, %s14
    %p11 = scmp.ge.s32.totalorder %s10, 4
    %s20 = sphi 0, %s22
    %s23 = sphi 0, %s20
    %s24 = sphi 0, %s23
    %s40 = sphi 0, %s24
    %s44 = sphi 0, %s44
    %s46 = sphi 0, %s44
    %s47 = sphi 0, %s46
    %s61 = sphi 0, %s47
    %s65 = sphi 0, %s65
    %s67 = sphi 0, %s65
    %s68 = sphi 0, %s67
    %s82 = sphi 0, %s68
    %s86 = sphi 0, %s86
    %s88 = sphi 0, %s86
    %s89 = sphi 0, %s88
    %s103 = sphi 0, %s89
  $region4: #{basic_block_forward.4} parent=0 // loop_header_branch
    %13 = sbr.rel (%p11) target = $region8
  $region5: #{basic_block_forward.4} parent=0 // loop_body
    %s15 = ssub.s32 %s10, 1
    %s16 = ssub.s32 %s10, 2
    %s17 = sadd.s32 %s10, 1
    %s18 = ssub.s32 %s10, %s17
    %p19 = scmp.eq.s32.totalorder %s18, 0
    %s21 = sadd.s32 %s20, 1
    %s22 = scalar_select %p19, %s20, %s21
    %p25 = pneg %p19
    %p26 = scmp.eq.s32.totalorder %s10, 1
    %p27 = por %p25, %p26
    %p28 = scmp.ne.s32.totalorder %s20, %s23
    %p29 = scmp.eq.s32.totalorder %s10, 0
    %p30 = por %p28, %p29
    %p31 = scmp.ne.s32.totalorder %s20, %s23
    %p32 = scmp.eq.s32.totalorder %s15, 1
    %p33 = por %p31, %p32
    %p34 = scmp.ne.s32.totalorder %s23, %s24
    %p35 = scmp.eq.s32.totalorder %s15, 0
    %p36 = por %p34, %p35
    %p37 = scmp.ne.s32.totalorder %s23, %s24
    %p38 = scmp.eq.s32.totalorder %s16, 1
    %p39 = por %p37, %p38
    %p41 = scmp.ne.s32.totalorder %s24, %s40
    %p42 = scmp.eq.s32.totalorder %s16, 0
    %p43 = por %p41, %p42
    %s45 = sadd.s32 %s44, 1
    %p48 = scmp.eq.s32.totalorder %s10, 1
    %p49 = scmp.ne.s32.totalorder %s44, %s46
    %p50 = scmp.eq.s32.totalorder %s10, 0
    %p51 = por %p49, %p50
    %p52 = scmp.ne.s32.totalorder %s44, %s46
    %p53 = scmp.eq.s32.totalorder %s15, 1
    %p54 = por %p52, %p53
    %p55 = scmp.ne.s32.totalorder %s46, %s47
    %p56 = scmp.eq.s32.totalorder %s15, 0
    %p57 = por %p55, %p56
    %p58 = scmp.ne.s32.totalorder %s46, %s47
    %p59 = scmp.eq.s32.totalorder %s16, 1
    %p60 = por %p58, %p59
    %p62 = scmp.ne.s32.totalorder %s47, %s61
    %p63 = scmp.eq.s32.totalorder %s16, 0
    %p64 = por %p62, %p63
    %s66 = sadd.s32 %s65, 1
    %p69 = scmp.eq.s32.totalorder %s10, 1
    %p70 = scmp.ne.s32.totalorder %s65, %s67
    %p71 = scmp.eq.s32.totalorder %s10, 0
    %p72 = por %p70, %p71
    %p73 = scmp.ne.s32.totalorder %s65, %s67
    %p74 = scmp.eq.s32.totalorder %s15, 1
    %p75 = por %p73, %p74
    %p76 = scmp.ne.s32.totalorder %s67, %s68
    %p77 = scmp.eq.s32.totalorder %s15, 0
    %p78 = por %p76, %p77
    %p79 = scmp.ne.s32.totalorder %s67, %s68
    %p80 = scmp.eq.s32.totalorder %s16, 1
    %p81 = por %p79, %p80
    %p83 = scmp.ne.s32.totalorder %s68, %s82
    %p84 = scmp.eq.s32.totalorder %s16, 0
    %p85 = por %p83, %p84
    %s87 = sadd.s32 %s86, 1
    %p90 = scmp.eq.s32.totalorder %s10, 1
    %p91 = scmp.ne.s32.totalorder %s86, %s88
    %p92 = scmp.eq.s32.totalorder %s10, 0
    %p93 = por %p91, %p92
    %p94 = scmp.ne.s32.totalorder %s86, %s88
    %p95 = scmp.eq.s32.totalorder %s15, 1
    %p96 = por %p94, %p95
    %p97 = scmp.ne.s32.totalorder %s88, %s89
    %p98 = scmp.eq.s32.totalorder %s15, 0
    %p99 = por %p97, %p98
    %p100 = scmp.ne.s32.totalorder %s88, %s89
    %p101 = scmp.eq.s32.totalorder %s16, 1
    %p102 = por %p100, %p101
    %p104 = scmp.ne.s32.totalorder %s89, %s103
    %p105 = scmp.eq.s32.totalorder %s16, 0
    %p106 = por %p104, %p105
    %p107 = scmp.le.s32.totalorder 1, %s10
    %p108 = scmp.lt.s32.totalorder %s10, 3
    %p109 = pnand %p107, %p108
    %p110 = pneg %p109
    // Predicated region
    $region9: #{basic_block_forward.4} parent=5 // pred_check
      _
    $region10: #{basic_block_forward.4} parent=5 // pred_check_branch
      %112 = sbr.rel (%p109) target = $region12
    $region11: #{basic_block_forward.4} parent=5 // pred_region
      %s113 = ssub.s32 %s10, 1
      // Predicated region
      $region13: #{basic_block_forward.4} parent=11 // pred_check
        %p114 = pneg %p57
      $region14: #{basic_block_forward.4} parent=11 // pred_check_branch
        %116 = sbr.rel (%p114) target = $region16
      $region15: #{basic_block_forward.4} parent=11 // pred_region
        _
      $region16: #{basic_block_forward.4} parent=11 // pred_fallthru
        _
    $region12: #{basic_block_forward.4} parent=5 // pred_fallthru
      _
    %p117 = scmp.lt.s32.totalorder %s10, 2
    // Predicated region
    $region17: #{basic_block_forward.4} parent=5 // pred_check
      %p118 = pneg %p117
    $region18: #{basic_block_forward.4} parent=5 // pred_check_branch
      %120 = sbr.rel (%p118) target = $region20
    $region19: #{basic_block_forward.4} parent=5 // pred_region
      // Predicated region
      $region21: #{basic_block_forward.4} parent=19 // pred_check
        %p121 = pneg %p30
      $region22: #{basic_block_forward.4} parent=19 // pred_check_branch
        %123 = sbr.rel (%p121) target = $region24
      $region23: #{basic_block_forward.4} parent=19 // pred_region
        %s124 = smul.u32 32, %s10
        %p125 = scmp.lt.s32.totalorder %s124, 63
        %s126 = scalar_select %p125, %s124, 63
        %s127 = smul.addr %s126, 4
        %s128 = scalar_lea.vmem %s0, %s127
        %s129 = smul.u32 32, %s10
      $region24: #{basic_block_forward.4} parent=19 // pred_fallthru
        _
    $region20: #{basic_block_forward.4} parent=5 // pred_fallthru
      _
    %p130 = scmp.le.s32.totalorder 1, %s10
    %p131 = scmp.lt.s32.totalorder %s10, 3
    %p132 = pnand %p130, %p131
    %p133 = pneg %p132
    // Predicated region
    $region25: #{basic_block_forward.4} parent=5 // pred_check
      _
    $region26: #{basic_block_forward.4} parent=5 // pred_check_branch
      %135 = sbr.rel (%p132) target = $region28
    $region27: #{basic_block_forward.4} parent=5 // pred_region
      %s136 = ssub.s32 %s10, 1
      %s137 = smul.u32 32, %s15
      %p138 = scmp.lt.s32.totalorder %s137, 63
      %s139 = scalar_select %p138, %s137, 63
      %s140 = smul.addr %s139, 4
      %s141 = scalar_lea.vmem %s0, %s140
      %p142 = pneg %p36
      %p143 = pneg %p33
      %p144 = pneg %p57
      %p145 = pneg %p54
      %p146 = pneg %p78
      %p147 = pneg %p75
      %p148 = pneg %p99
      %p149 = pneg %p96
      %s150 = smul.u32 32, %s15
      %p151 = scmp.lt.s32.totalorder %s150, 63
      %s152 = scalar_select %p151, %s150, 63
      %s153 = smul.addr %s152, 4
      %s154 = scalar_lea.vmem %s0, %s153
      %s155 = smul.u32 32, %s15
      %v157 = vld [vmem:[%s154] sm:$0xf]
      %v158 = vld [vmem:[%s154 + $0x4] sm:$0xf]
      %v159 = vld [vmem:[%s154 + $0x8] sm:$0xf]
      %v160 = vld [vmem:[%s154 + $0xc] sm:$0xf]
      %v161 = vld [vmem:[%s154 + $0x10] sm:$0xf]
      %v162 = vld [vmem:[%s154 + $0x14] sm:$0xf]
      %v163 = vld [vmem:[%s154 + $0x18] sm:$0xf]
      %v164 = vld [vmem:[%s154 + $0x1c] sm:$0xf]
      %v165 = vld [vmem:[%s154 + $0x20] sm:$0xf]
      %v166 = vld [vmem:[%s154 + $0x24] sm:$0xf]
      %v167 = vld [vmem:[%s154 + $0x28] sm:$0xf]
      %v168 = vld [vmem:[%s154 + $0x2c] sm:$0xf]
      %v169 = vld [vmem:[%s154 + $0x30] sm:$0xf]
      %v170 = vld [vmem:[%s154 + $0x34] sm:$0xf]
      %v171 = vld [vmem:[%s154 + $0x38] sm:$0xf]
      %v172 = vld [vmem:[%s154 + $0x3c] sm:$0xf]
      %v173 = vld [vmem:[%s154 + $0x40] sm:$0xf]
      %v174 = vld [vmem:[%s154 + $0x44] sm:$0xf]
      %v175 = vld [vmem:[%s154 + $0x48] sm:$0xf]
      %v176 = vld [vmem:[%s154 + $0x4c] sm:$0xf]
      %v177 = vld [vmem:[%s154 + $0x50] sm:$0xf]
      %v178 = vld [vmem:[%s154 + $0x54] sm:$0xf]
      %v179 = vld [vmem:[%s154 + $0x58] sm:$0xf]
      %v180 = vld [vmem:[%s154 + $0x5c] sm:$0xf]
      %v181 = vld [vmem:[%s154 + $0x60] sm:$0xf]
      %v182 = vld [vmem:[%s154 + $0x64] sm:$0xf]
      %v183 = vld [vmem:[%s154 + $0x68] sm:$0xf]
      %v184 = vld [vmem:[%s154 + $0x6c] sm:$0xf]
      %v185 = vld [vmem:[%s154 + $0x70] sm:$0xf]
      %v186 = vld [vmem:[%s154 + $0x74] sm:$0xf]
      %v187 = vld [vmem:[%s154 + $0x78] sm:$0xf]
      %v188 = vld [vmem:[%s154 + $0x7c] sm:$0xf]
      %v189 = vld [vmem:[%s1] sm:$0xf]
      %v190 = vld [vmem:[%s1 + $0x4] sm:$0xf]
      %v191 = vld [vmem:[%s1 + $0x8] sm:$0xf]
      %v192 = vld [vmem:[%s1 + $0xc] sm:$0xf]
      %v193 = vld [vmem:[%s1 + $0x10] sm:$0xf]
      %v194 = vld [vmem:[%s1 + $0x14] sm:$0xf]
      %v227 = vunpack.c.l.b16 %v157
      %v228 = vunpack.c.l.b16 %v158
      %v229 = vunpack.c.l.b16 %v159
      %v230 = vunpack.c.l.b16 %v160
      %v231 = vunpack.c.l.b16 %v161
      %v232 = vunpack.c.l.b16 %v162
      %v233 = vunpack.c.l.b16 %v163
      %v234 = vunpack.c.l.b16 %v164
      %v235 = vunpack.c.l.b16 %v165
      %v236 = vunpack.c.l.b16 %v166
      %v237 = vunpack.c.l.b16 %v167
      %v238 = vunpack.c.l.b16 %v168
      %v239 = vunpack.c.l.b16 %v169
      %v240 = vunpack.c.l.b16 %v170
      %v241 = vunpack.c.l.b16 %v171
      %v242 = vunpack.c.l.b16 %v172
      %v243 = vunpack.c.l.b16 %v173
      %v244 = vunpack.c.l.b16 %v174
      %v245 = vunpack.c.l.b16 %v175
      %v246 = vunpack.c.l.b16 %v176
      %v247 = vunpack.c.l.b16 %v177
      %v248 = vunpack.c.l.b16 %v178
      %v249 = vunpack.c.l.b16 %v179
      %v250 = vunpack.c.l.b16 %v180
      %v251 = vunpack.c.l.b16 %v181
      %v252 = vunpack.c.l.b16 %v182
      %v253 = vunpack.c.l.b16 %v183
      %v254 = vunpack.c.l.b16 %v184
      %v255 = vunpack.c.l.b16 %v185
      %v256 = vunpack.c.l.b16 %v186
      %v257 = vunpack.c.l.b16 %v187
      %v258 = vunpack.c.l.b16 %v188
      %v259 = vpack.c.b16 %v228, %v227
      %v260 = vpack.c.b16 %v230, %v229
      %v261 = vpack.c.b16 %v232, %v231
      %v262 = vpack.c.b16 %v234, %v233
      %v263 = vpack.c.b16 %v236, %v235
      %v264 = vpack.c.b16 %v238, %v237
      %v265 = vpack.c.b16 %v240, %v239
      %v266 = vpack.c.b16 %v242, %v241
      %v267 = vpack.c.b16 %v244, %v243
      %v268 = vpack.c.b16 %v246, %v245
      %v269 = vpack.c.b16 %v248, %v247
      %v270 = vpack.c.b16 %v250, %v249
      %v271 = vpack.c.b16 %v252, %v251
      %v272 = vpack.c.b16 %v254, %v253
      %v273 = vpack.c.b16 %v256, %v255
      %v274 = vpack.c.b16 %v258, %v257
      %v281 = vunpack.c.l.b16 %v189
      %v282 = vunpack.c.l.b16 %v190
      %v283 = vunpack.c.l.b16 %v191
      %v284 = vunpack.c.l.b16 %v192
      %v285 = vunpack.c.l.b16 %v193
      %v286 = vunpack.c.l.b16 %v194
      %v287 = vpack.c.b16 %v282, %v281
      %v288 = vpack.c.b16 %v284, %v283
      %v289 = vpack.c.b16 %v286, %v285
      %vm293 = vcmask 392192
      %v295 = vsel %vm293, %v259, 0
      %v298 = vsel %vm293, %v260, 0
      %v301 = vsel %vm293, %v261, 0
      %v304 = vsel %vm293, %v262, 0
      %v307 = vsel %vm293, %v263, 0
      %v310 = vsel %vm293, %v264, 0
      %v313 = vsel %vm293, %v265, 0
      %v316 = vsel %vm293, %v266, 0
      %v319 = vsel %vm293, %v267, 0
      %v322 = vsel %vm293, %v268, 0
      %v325 = vsel %vm293, %v269, 0
      %v328 = vsel %vm293, %v270, 0
      %v331 = vsel %vm293, %v271, 0
      %v334 = vsel %vm293, %v272, 0
      %v337 = vsel %vm293, %v273, 0
      %v340 = vsel %vm293, %v274, 0
      %342 = vmatpush.bf16.msra.mxu0 0
      %343 = vmatpush.bf16.msra.mxu0 0
      %344 = vmatpush.bf16.msra.mxu0 0
      %345 = vmatpush.bf16.msra.mxu0 0
      %346 = vmatpush.bf16.msra.mxu0 0
      %347 = vmatpush.bf16.msra.mxu0 %v289
      %348 = vmatpush.bf16.msra.mxu0 %v288
      %349 = vmatpush.bf16.msra.mxu0 %v287
      %350 = vmatmul.bf16.gmra.mxu0 %v295
      %v351 = vpop.f32.mrf.mxu0
      %v352 = vadd.f32 0.0, %v351
      %v353 = vpop.f32.mrf.mxu0
      %v354 = vadd.f32 0.0, %v353
      %355 = vmatmul.bf16.gmra.mxu0 %v298
      %v356 = vpop.f32.mrf.mxu0
      %v357 = vadd.f32 0.0, %v356
      %v358 = vpop.f32.mrf.mxu0
      %v359 = vadd.f32 0.0, %v358
      %360 = vmatmul.bf16.gmra.mxu0 %v301
      %v361 = vpop.f32.mrf.mxu0
      %v362 = vadd.f32 0.0, %v361
      %v363 = vpop.f32.mrf.mxu0
      %v364 = vadd.f32 0.0, %v363
      %365 = vmatmul.bf16.gmra.mxu0 %v304
      %v366 = vpop.f32.mrf.mxu0
      %v367 = vadd.f32 0.0, %v366
      %v368 = vpop.f32.mrf.mxu0
      %v369 = vadd.f32 0.0, %v368
      %370 = vmatmul.bf16.gmra.mxu0 %v307
      %v371 = vpop.f32.mrf.mxu0
      %v372 = vadd.f32 0.0, %v371
      %v373 = vpop.f32.mrf.mxu0
      %v374 = vadd.f32 0.0, %v373
      %375 = vmatmul.bf16.gmra.mxu0 %v310
      %v376 = vpop.f32.mrf.mxu0
      %v377 = vadd.f32 0.0, %v376
      %v378 = vpop.f32.mrf.mxu0
      %v379 = vadd.f32 0.0, %v378
      %380 = vmatmul.bf16.gmra.mxu0 %v313
      %v381 = vpop.f32.mrf.mxu0
      %v382 = vadd.f32 0.0, %v381
      %v383 = vpop.f32.mrf.mxu0
      %v384 = vadd.f32 0.0, %v383
      %385 = vmatmul.bf16.gmra.mxu0 %v316
      %v386 = vpop.f32.mrf.mxu0
      %v387 = vadd.f32 0.0, %v386
      %v388 = vpop.f32.mrf.mxu0
      %v389 = vadd.f32 0.0, %v388
      %390 = vmatmul.bf16.gmra.mxu0 %v319
      %v391 = vpop.f32.mrf.mxu0
      %v392 = vadd.f32 0.0, %v391
      %v393 = vpop.f32.mrf.mxu0
      %v394 = vadd.f32 0.0, %v393
      %395 = vmatmul.bf16.gmra.mxu0 %v322
      %v396 = vpop.f32.mrf.mxu0
      %v397 = vadd.f32 0.0, %v396
      %v398 = vpop.f32.mrf.mxu0
      %v399 = vadd.f32 0.0, %v398
      %400 = vmatmul.bf16.gmra.mxu0 %v325
      %v401 = vpop.f32.mrf.mxu0
      %v402 = vadd.f32 0.0, %v401
      %v403 = vpop.f32.mrf.mxu0
      %v404 = vadd.f32 0.0, %v403
      %405 = vmatmul.bf16.gmra.mxu0 %v328
      %v406 = vpop.f32.mrf.mxu0
      %v407 = vadd.f32 0.0, %v406
      %v408 = vpop.f32.mrf.mxu0
      %v409 = vadd.f32 0.0, %v408
      %410 = vmatmul.bf16.gmra.mxu0 %v331
      %v411 = vpop.f32.mrf.mxu0
      %v412 = vadd.f32 0.0, %v411
      %v413 = vpop.f32.mrf.mxu0
      %v414 = vadd.f32 0.0, %v413
      %415 = vmatmul.bf16.gmra.mxu0 %v334
      %v416 = vpop.f32.mrf.mxu0
      %v417 = vadd.f32 0.0, %v416
      %v418 = vpop.f32.mrf.mxu0
      %v419 = vadd.f32 0.0, %v418
      %420 = vmatmul.bf16.gmra.mxu0 %v337
      %v421 = vpop.f32.mrf.mxu0
      %v422 = vadd.f32 0.0, %v421
      %v423 = vpop.f32.mrf.mxu0
      %v424 = vadd.f32 0.0, %v423
      %425 = vmatmul.bf16.gmra.mxu0 %v340
      %v426 = vpop.f32.mrf.mxu0
      %v427 = vadd.f32 0.0, %v426
      %v428 = vpop.f32.mrf.mxu0
      %v429 = vadd.f32 0.0, %v428
      %430 = vdwg.mxu0
      %p431 = scmp.eq.s32.totalorder %s15, 0
      // Predicated region
      $region29: #{basic_block_forward.4} parent=27 // pred_check
        %p432 = pneg %p431
      $region30: #{basic_block_forward.4} parent=27 // pred_check_branch
        %434 = sbr.rel (%p432) target = $region32
      $region31: #{basic_block_forward.4} parent=27 // pred_region
        %435 = vst [vmem:[%s2] sm:$0x1] 0.0
        %436 = vst [vmem:[%s3] sm:$0x1] 0.0
      $region32: #{basic_block_forward.4} parent=27 // pred_fallthru
        _
      %v437 = vld [vmem:[%s2] sm:$0x1]
      %v438 = vadd.f32 %v352, %v354
      %v439 = vadd.f32 %v438, %v357
      %v440 = vadd.f32 %v439, %v359
      %v441 = vadd.f32 %v440, %v362
      %v442 = vadd.f32 %v441, %v364
      %v443 = vadd.f32 %v442, %v367
      %v444 = vadd.f32 %v443, %v369
      %v445 = vadd.f32 %v444, %v372
      %v446 = vadd.f32 %v445, %v374
      %v447 = vadd.f32 %v446, %v377
      %v448 = vadd.f32 %v447, %v379
      %v449 = vadd.f32 %v448, %v382
      %v450 = vadd.f32 %v449, %v384
      %v451 = vadd.f32 %v450, %v387
      %v452 = vadd.f32 %v451, %v389
      %v453 = vadd.f32 %v452, %v392
      %v454 = vadd.f32 %v453, %v394
      %v455 = vadd.f32 %v454, %v397
      %v456 = vadd.f32 %v455, %v399
      %v457 = vadd.f32 %v456, %v402
      %v458 = vadd.f32 %v457, %v404
      %v459 = vadd.f32 %v458, %v407
      %v460 = vadd.f32 %v459, %v409
      %v461 = vadd.f32 %v460, %v412
      %v462 = vadd.f32 %v461, %v414
      %v463 = vadd.f32 %v462, %v417
      %v464 = vadd.f32 %v463, %v419
      %v465 = vadd.f32 %v464, %v422
      %v466 = vadd.f32 %v465, %v424
      %v467 = vadd.f32 %v466, %v427
      %v468 = vadd.f32 %v467, %v429
      %v469 = vrot.slane %v468, 4
      %v470 = vadd.f32 %v468, %v469
      %v471 = vrot.slane %v470, 2
      %v472 = vadd.f32 %v470, %v471
      %v473 = vrot.slane %v472, 1
      %v474 = vadd.f32 %v472, %v473
      %v475 = vadd.f32 %v437, %v474
      %476 = vst [vmem:[%s2] sm:$0x1] %v475
      %v477 = vld [vmem:[%s3] sm:$0x1]
      %v478 = vmul.f32 %v352, %v352
      %v479 = vmul.f32 %v354, %v354
      %v480 = vmul.f32 %v357, %v357
      %v481 = vmul.f32 %v359, %v359
      %v482 = vmul.f32 %v362, %v362
      %v483 = vmul.f32 %v364, %v364
      %v484 = vmul.f32 %v367, %v367
      %v485 = vmul.f32 %v369, %v369
      %v486 = vmul.f32 %v372, %v372
      %v487 = vmul.f32 %v374, %v374
      %v488 = vmul.f32 %v377, %v377
      %v489 = vmul.f32 %v379, %v379
      %v490 = vmul.f32 %v382, %v382
      %v491 = vmul.f32 %v384, %v384
      %v492 = vmul.f32 %v387, %v387
      %v493 = vmul.f32 %v389, %v389
      %v494 = vmul.f32 %v392, %v392
      %v495 = vmul.f32 %v394, %v394
      %v496 = vmul.f32 %v397, %v397
      %v497 = vmul.f32 %v399, %v399
      %v498 = vmul.f32 %v402, %v402
      %v499 = vmul.f32 %v404, %v404
      %v500 = vmul.f32 %v407, %v407
      %v501 = vmul.f32 %v409, %v409
      %v502 = vmul.f32 %v412, %v412
      %v503 = vmul.f32 %v414, %v414
      %v504 = vmul.f32 %v417, %v417
      %v505 = vmul.f32 %v419, %v419
      %v506 = vmul.f32 %v422, %v422
      %v507 = vmul.f32 %v424, %v424
      %v508 = vmul.f32 %v427, %v427
      %v509 = vmul.f32 %v429, %v429
      %v510 = vadd.f32 %v478, %v479
      %v511 = vadd.f32 %v510, %v480
      %v512 = vadd.f32 %v511, %v481
      %v513 = vadd.f32 %v512, %v482
      %v514 = vadd.f32 %v513, %v483
      %v515 = vadd.f32 %v514, %v484
      %v516 = vadd.f32 %v515, %v485
      %v517 = vadd.f32 %v516, %v486
      %v518 = vadd.f32 %v517, %v487
      %v519 = vadd.f32 %v518, %v488
      %v520 = vadd.f32 %v519, %v489
      %v521 = vadd.f32 %v520, %v490
      %v522 = vadd.f32 %v521, %v491
      %v523 = vadd.f32 %v522, %v492
      %v524 = vadd.f32 %v523, %v493
      %v525 = vadd.f32 %v524, %v494
      %v526 = vadd.f32 %v525, %v495
      %v527 = vadd.f32 %v526, %v496
      %v528 = vadd.f32 %v527, %v497
      %v529 = vadd.f32 %v528, %v498
      %v530 = vadd.f32 %v529, %v499
      %v531 = vadd.f32 %v530, %v500
      %v532 = vadd.f32 %v531, %v501
      %v533 = vadd.f32 %v532, %v502
      %v534 = vadd.f32 %v533, %v503
      %v535 = vadd.f32 %v534, %v504
      %v536 = vadd.f32 %v535, %v505
      %v537 = vadd.f32 %v536, %v506
      %v538 = vadd.f32 %v537, %v507
      %v539 = vadd.f32 %v538, %v508
      %v540 = vadd.f32 %v539, %v509
      %v541 = vrot.slane %v540, 4
      %v542 = vadd.f32 %v540, %v541
      %v543 = vrot.slane %v542, 2
      %v544 = vadd.f32 %v542, %v543
      %v545 = vrot.slane %v544, 1
      %v546 = vadd.f32 %v544, %v545
      %v547 = vadd.f32 %v477, %v546
      %548 = vst [vmem:[%s3] sm:$0x1] %v547
      // Predicated region
      $region33: #{basic_block_forward.4} parent=27 // pred_check
        %p549 = pneg %p75
      $region34: #{basic_block_forward.4} parent=27 // pred_check_branch
        %551 = sbr.rel (%p549) target = $region36
      $region35: #{basic_block_forward.4} parent=27 // pred_region
        _
      $region36: #{basic_block_forward.4} parent=27 // pred_fallthru
        _
      // Predicated region
      $region37: #{basic_block_forward.4} parent=27 // pred_check
        %p552 = pneg %p96
      $region38: #{basic_block_forward.4} parent=27 // pred_check_branch
        %554 = sbr.rel (%p552) target = $region40
      $region39: #{basic_block_forward.4} parent=27 // pred_region
        _
      $region40: #{basic_block_forward.4} parent=27 // pred_fallthru
        _
      // Predicated region
      $region41: #{basic_block_forward.4} parent=27 // pred_check
        %p555 = pneg %p75
      $region42: #{basic_block_forward.4} parent=27 // pred_check_branch
        %557 = sbr.rel (%p555) target = $region44
      $region43: #{basic_block_forward.4} parent=27 // pred_region
        _
      $region44: #{basic_block_forward.4} parent=27 // pred_fallthru
        _
      // Predicated region
      $region45: #{basic_block_forward.4} parent=27 // pred_check
        %p558 = pneg %p96
      $region46: #{basic_block_forward.4} parent=27 // pred_check_branch
        %560 = sbr.rel (%p558) target = $region48
      $region47: #{basic_block_forward.4} parent=27 // pred_region
        _
      $region48: #{basic_block_forward.4} parent=27 // pred_fallthru
        _
    $region28: #{basic_block_forward.4} parent=5 // pred_fallthru
      _
    %p561 = scmp.le.s32.totalorder 2, %s10
    // Predicated region
    $region49: #{basic_block_forward.4} parent=5 // pred_check
      %p562 = pneg %p561
    $region50: #{basic_block_forward.4} parent=5 // pred_check_branch
      %564 = sbr.rel (%p562) target = $region52
    $region51: #{basic_block_forward.4} parent=5 // pred_region
      %s565 = ssub.s32 %s10, 2
    $region52: #{basic_block_forward.4} parent=5 // pred_fallthru
      _
  $region6: #{basic_block_forward.4} parent=0 // loop_footer
    %s14 = sadd.s32 1, %s10
  $region7: #{basic_block_forward.4} parent=0 // loop_footer_branch
    %9 = sbr.rel target = $region3
  $region8: #{basic_block_forward.4} parent=0 // loop_exit
    _

// kernel: basic_block_forward.5
$region0: #{basic_block_forward.5}
  #allocation0 [shape = 'u32[]', space=smem, size = 0x4, offset = 0x4, fixed_abs, tag = 'smem constant byte address 0x4 - core index']
  #allocation1 [shape = 'u32[72,128]{1,0:T(1,128)}', space=vmem, size = 0x9000, scoped, tag = 'internal scratch']
  %s0 = inlined_call_operand.vmem [shape: bf16[512,48], index: 0, kind: input, shape index: {}]
  %s1 = inlined_call_operand.vmem [shape: bf16[48,128], index: 1, kind: input, shape index: {}]
  %s2 = inlined_call_operand.vmem [shape: f32[1,128], index: 2, kind: input, shape index: {}]
  %s3 = inlined_call_operand.vmem [shape: f32[1,128], index: 3, kind: input, shape index: {}]
  %s4 = inlined_call_operand.vmem [shape: f32[512,128], index: 4, kind: output, shape index: {}]
  %s5 = sld [smem:[#allocation0]]
  $region49: #{basic_block_forward.5} parent=0
    _
  %s7 = ssub.s32 1, %s5
  %s8 = scalar_select 0, %s7, %s5
  loop: start=0, step=1, limit=4
  $region2: #{basic_block_forward.5} parent=0 // loop_pre_header
    _
  $region3: #{basic_block_forward.5} parent=0 // loop_header
    %s10 = sphi 0, %s14
    %p11 = scmp.ge.s32.totalorder %s10, 4
    %s20 = sphi 0, %s22
    %s23 = sphi 0, %s20
    %s24 = sphi 0, %s23
    %s40 = sphi 0, %s24
    %s44 = sphi 0, %s44
    %s46 = sphi 0, %s44
    %s47 = sphi 0, %s46
    %s61 = sphi 0, %s47
    %s65 = sphi 0, %s65
    %s67 = sphi 0, %s65
    %s68 = sphi 0, %s67
    %s82 = sphi 0, %s68
    %s86 = sphi 0, %s86
    %s88 = sphi 0, %s86
    %s89 = sphi 0, %s88
    %s103 = sphi 0, %s89
    %s109 = sphi 0, %s111
    %s112 = sphi 0, %s109
    %s113 = sphi 0, %s112
    %s129 = sphi 0, %s113
  $region4: #{basic_block_forward.5} parent=0 // loop_header_branch
    %13 = sbr.rel (%p11) target = $region8
  $region5: #{basic_block_forward.5} parent=0 // loop_body
    %s15 = ssub.s32 %s10, 1
    %s16 = ssub.s32 %s10, 2
    %s17 = sadd.s32 %s10, 1
    %s18 = ssub.s32 %s10, %s17
    %p19 = scmp.eq.s32.totalorder %s18, 0
    %s21 = sadd.s32 %s20, 1
    %s22 = scalar_select %p19, %s20, %s21
    %p25 = pneg %p19
    %p26 = scmp.eq.s32.totalorder %s10, 1
    %p27 = por %p25, %p26
    %p28 = scmp.ne.s32.totalorder %s20, %s23
    %p29 = scmp.eq.s32.totalorder %s10, 0
    %p30 = por %p28, %p29
    %p31 = scmp.ne.s32.totalorder %s20, %s23
    %p32 = scmp.eq.s32.totalorder %s15, 1
    %p33 = por %p31, %p32
    %p34 = scmp.ne.s32.totalorder %s23, %s24
    %p35 = scmp.eq.s32.totalorder %s15, 0
    %p36 = por %p34, %p35
    %p37 = scmp.ne.s32.totalorder %s23, %s24
    %p38 = scmp.eq.s32.totalorder %s16, 1
    %p39 = por %p37, %p38
    %p41 = scmp.ne.s32.totalorder %s24, %s40
    %p42 = scmp.eq.s32.totalorder %s16, 0
    %p43 = por %p41, %p42
    %s45 = sadd.s32 %s44, 1
    %p48 = scmp.eq.s32.totalorder %s10, 1
    %p49 = scmp.ne.s32.totalorder %s44, %s46
    %p50 = scmp.eq.s32.totalorder %s10, 0
    %p51 = por %p49, %p50
    %p52 = scmp.ne.s32.totalorder %s44, %s46
    %p53 = scmp.eq.s32.totalorder %s15, 1
    %p54 = por %p52, %p53
    %p55 = scmp.ne.s32.totalorder %s46, %s47
    %p56 = scmp.eq.s32.totalorder %s15, 0
    %p57 = por %p55, %p56
    %p58 = scmp.ne.s32.totalorder %s46, %s47
    %p59 = scmp.eq.s32.totalorder %s16, 1
    %p60 = por %p58, %p59
    %p62 = scmp.ne.s32.totalorder %s47, %s61
    %p63 = scmp.eq.s32.totalorder %s16, 0
    %p64 = por %p62, %p63
    %s66 = sadd.s32 %s65, 1
    %p69 = scmp.eq.s32.totalorder %s10, 1
    %p70 = scmp.ne.s32.totalorder %s65, %s67
    %p71 = scmp.eq.s32.totalorder %s10, 0
    %p72 = por %p70, %p71
    %p73 = scmp.ne.s32.totalorder %s65, %s67
    %p74 = scmp.eq.s32.totalorder %s15, 1
    %p75 = por %p73, %p74
    %p76 = scmp.ne.s32.totalorder %s67, %s68
    %p77 = scmp.eq.s32.totalorder %s15, 0
    %p78 = por %p76, %p77
    %p79 = scmp.ne.s32.totalorder %s67, %s68
    %p80 = scmp.eq.s32.totalorder %s16, 1
    %p81 = por %p79, %p80
    %p83 = scmp.ne.s32.totalorder %s68, %s82
    %p84 = scmp.eq.s32.totalorder %s16, 0
    %p85 = por %p83, %p84
    %s87 = sadd.s32 %s86, 1
    %p90 = scmp.eq.s32.totalorder %s10, 1
    %p91 = scmp.ne.s32.totalorder %s86, %s88
    %p92 = scmp.eq.s32.totalorder %s10, 0
    %p93 = por %p91, %p92
    %p94 = scmp.ne.s32.totalorder %s86, %s88
    %p95 = scmp.eq.s32.totalorder %s15, 1
    %p96 = por %p94, %p95
    %p97 = scmp.ne.s32.totalorder %s88, %s89
    %p98 = scmp.eq.s32.totalorder %s15, 0
    %p99 = por %p97, %p98
    %p100 = scmp.ne.s32.totalorder %s88, %s89
    %p101 = scmp.eq.s32.totalorder %s16, 1
    %p102 = por %p100, %p101
    %p104 = scmp.ne.s32.totalorder %s89, %s103
    %p105 = scmp.eq.s32.totalorder %s16, 0
    %p106 = por %p104, %p105
    %s107 = ssub.s32 %s10, %s17
    %p108 = scmp.eq.s32.totalorder %s107, 0
    %s110 = sadd.s32 %s109, 1
    %s111 = scalar_select %p108, %s109, %s110
    %p114 = pneg %p108
    %p115 = scmp.eq.s32.totalorder %s10, 1
    %p116 = por %p114, %p115
    %p117 = scmp.ne.s32.totalorder %s109, %s112
    %p118 = scmp.eq.s32.totalorder %s10, 0
    %p119 = por %p117, %p118
    %p120 = scmp.ne.s32.totalorder %s109, %s112
    %p121 = scmp.eq.s32.totalorder %s15, 1
    %p122 = por %p120, %p121
    %p123 = scmp.ne.s32.totalorder %s112, %s113
    %p124 = scmp.eq.s32.totalorder %s15, 0
    %p125 = por %p123, %p124
    %p126 = scmp.ne.s32.totalorder %s112, %s113
    %p127 = scmp.eq.s32.totalorder %s16, 1
    %p128 = por %p126, %p127
    %p130 = scmp.ne.s32.totalorder %s113, %s129
    %p131 = scmp.eq.s32.totalorder %s16, 0
    %p132 = por %p130, %p131
    %p133 = scmp.le.s32.totalorder 1, %s10
    %p134 = scmp.lt.s32.totalorder %s10, 3
    %p135 = pnand %p133, %p134
    %p136 = pneg %p135
    // Predicated region
    $region9: #{basic_block_forward.5} parent=5 // pred_check
      _
    $region10: #{basic_block_forward.5} parent=5 // pred_check_branch
      %138 = sbr.rel (%p135) target = $region12
    $region11: #{basic_block_forward.5} parent=5 // pred_region
      %s139 = ssub.s32 %s10, 1
      // Predicated region
      $region13: #{basic_block_forward.5} parent=11 // pred_check
        %p140 = pneg %p57
      $region14: #{basic_block_forward.5} parent=11 // pred_check_branch
        %142 = sbr.rel (%p140) target = $region16
      $region15: #{basic_block_forward.5} parent=11 // pred_region
        _
      $region16: #{basic_block_forward.5} parent=11 // pred_fallthru
        _
      // Predicated region
      $region17: #{basic_block_forward.5} parent=11 // pred_check
        %p143 = pneg %p78
      $region18: #{basic_block_forward.5} parent=11 // pred_check_branch
        %145 = sbr.rel (%p143) target = $region20
      $region19: #{basic_block_forward.5} parent=11 // pred_region
        _
      $region20: #{basic_block_forward.5} parent=11 // pred_fallthru
        _
      // Predicated region
      $region21: #{basic_block_forward.5} parent=11 // pred_check
        %p146 = pneg %p99
      $region22: #{basic_block_forward.5} parent=11 // pred_check_branch
        %148 = sbr.rel (%p146) target = $region24
      $region23: #{basic_block_forward.5} parent=11 // pred_region
        _
      $region24: #{basic_block_forward.5} parent=11 // pred_fallthru
        _
    $region12: #{basic_block_forward.5} parent=5 // pred_fallthru
      _
    %p149 = scmp.lt.s32.totalorder %s10, 2
    // Predicated region
    $region25: #{basic_block_forward.5} parent=5 // pred_check
      %p150 = pneg %p149
    $region26: #{basic_block_forward.5} parent=5 // pred_check_branch
      %152 = sbr.rel (%p150) target = $region28
    $region27: #{basic_block_forward.5} parent=5 // pred_region
      // Predicated region
      $region29: #{basic_block_forward.5} parent=27 // pred_check
        %p153 = pneg %p30
      $region30: #{basic_block_forward.5} parent=27 // pred_check_branch
        %155 = sbr.rel (%p153) target = $region32
      $region31: #{basic_block_forward.5} parent=27 // pred_region
        %s156 = smul.u32 32, %s10
        %p157 = scmp.lt.s32.totalorder %s156, 63
        %s158 = scalar_select %p157, %s156, 63
        %s159 = smul.addr %s158, 4
        %s160 = scalar_lea.vmem %s0, %s159
        %s161 = smul.u32 32, %s10
      $region32: #{basic_block_forward.5} parent=27 // pred_fallthru
        _
    $region28: #{basic_block_forward.5} parent=5 // pred_fallthru
      _
    %p162 = scmp.le.s32.totalorder 1, %s10
    %p163 = scmp.lt.s32.totalorder %s10, 3
    %p164 = pnand %p162, %p163
    %p165 = pneg %p164
    // Predicated region
    $region33: #{basic_block_forward.5} parent=5 // pred_check
      _
    $region34: #{basic_block_forward.5} parent=5 // pred_check_branch
      %167 = sbr.rel (%p164) target = $region36
    $region35: #{basic_block_forward.5} parent=5 // pred_region
      %s168 = ssub.s32 %s10, 1
      %s169 = smul.u32 32, %s15
      %p170 = scmp.lt.s32.totalorder %s169, 63
      %s171 = scalar_select %p170, %s169, 63
      %s172 = smul.addr %s171, 4
      %s173 = scalar_lea.vmem %s0, %s172
      %p174 = pneg %p36
      %p175 = pneg %p33
      %p176 = pneg %p57
      %p177 = pneg %p54
      %p178 = pneg %p78
      %p179 = pneg %p75
      %p180 = pneg %p99
      %p181 = pneg %p96
      %p182 = pneg %p125
      %p183 = pneg %p122
      %s184 = smul.u32 32, %s15
      %p185 = scmp.lt.s32.totalorder %s184, 63
      %s186 = scalar_select %p185, %s184, 63
      %s187 = smul.addr %s186, 8
      %s188 = scalar_lea.vmem %s4, %s187
      %s189 = smul.u32 32, %s15
      %p190 = scmp.lt.s32.totalorder %s189, 63
      %s191 = scalar_select %p190, %s189, 63
      %s192 = smul.addr %s191, 4
      %s193 = scalar_lea.vmem %s0, %s192
      %s194 = smul.u32 32, %s15
      %s195 = smul.u32 32, %s15
      %p196 = scmp.lt.s32.totalorder %s195, 63
      %s197 = scalar_select %p196, %s195, 63
      %s198 = smul.addr %s197, 8
      %s199 = scalar_lea.vmem %s4, %s198
      %s200 = smul.u32 32, %s15
      %v202 = vld [vmem:[%s193] sm:$0xf]
      %v203 = vld [vmem:[%s193 + $0x4] sm:$0xf]
      %v204 = vld [vmem:[%s193 + $0x8] sm:$0xf]
      %v205 = vld [vmem:[%s193 + $0xc] sm:$0xf]
      %v206 = vld [vmem:[%s193 + $0x10] sm:$0xf]
      %v207 = vld [vmem:[%s193 + $0x14] sm:$0xf]
      %v208 = vld [vmem:[%s193 + $0x18] sm:$0xf]
      %v209 = vld [vmem:[%s193 + $0x1c] sm:$0xf]
      %v210 = vld [vmem:[%s193 + $0x20] sm:$0xf]
      %v211 = vld [vmem:[%s193 + $0x24] sm:$0xf]
      %v212 = vld [vmem:[%s193 + $0x28] sm:$0xf]
      %v213 = vld [vmem:[%s193 + $0x2c] sm:$0xf]
      %v214 = vld [vmem:[%s193 + $0x30] sm:$0xf]
      %v215 = vld [vmem:[%s193 + $0x34] sm:$0xf]
      %v216 = vld [vmem:[%s193 + $0x38] sm:$0xf]
      %v217 = vld [vmem:[%s193 + $0x3c] sm:$0xf]
      %v218 = vld [vmem:[%s193 + $0x40] sm:$0xf]
      %v219 = vld [vmem:[%s193 + $0x44] sm:$0xf]
      %v220 = vld [vmem:[%s193 + $0x48] sm:$0xf]
      %v221 = vld [vmem:[%s193 + $0x4c] sm:$0xf]
      %v222 = vld [vmem:[%s193 + $0x50] sm:$0xf]
      %v223 = vld [vmem:[%s193 + $0x54] sm:$0xf]
      %v224 = vld [vmem:[%s193 + $0x58] sm:$0xf]
      %v225 = vld [vmem:[%s193 + $0x5c] sm:$0xf]
      %v226 = vld [vmem:[%s193 + $0x60] sm:$0xf]
      %v227 = vld [vmem:[%s193 + $0x64] sm:$0xf]
      %v228 = vld [vmem:[%s193 + $0x68] sm:$0xf]
      %v229 = vld [vmem:[%s193 + $0x6c] sm:$0xf]
      %v230 = vld [vmem:[%s193 + $0x70] sm:$0xf]
      %v231 = vld [vmem:[%s193 + $0x74] sm:$0xf]
      %v232 = vld [vmem:[%s193 + $0x78] sm:$0xf]
      %v233 = vld [vmem:[%s193 + $0x7c] sm:$0xf]
      %v234 = vld [vmem:[%s1] sm:$0xf]
      %v235 = vld [vmem:[%s1 + $0x4] sm:$0xf]
      %v236 = vld [vmem:[%s1 + $0x8] sm:$0xf]
      %v237 = vld [vmem:[%s1 + $0xc] sm:$0xf]
      %v238 = vld [vmem:[%s1 + $0x10] sm:$0xf]
      %v239 = vld [vmem:[%s1 + $0x14] sm:$0xf]
      %v272 = vunpack.c.l.b16 %v202
      %v273 = vunpack.c.l.b16 %v203
      %v274 = vunpack.c.l.b16 %v204
      %v275 = vunpack.c.l.b16 %v205
      %v276 = vunpack.c.l.b16 %v206
      %v277 = vunpack.c.l.b16 %v207
      %v278 = vunpack.c.l.b16 %v208
      %v279 = vunpack.c.l.b16 %v209
      %v280 = vunpack.c.l.b16 %v210
      %v281 = vunpack.c.l.b16 %v211
      %v282 = vunpack.c.l.b16 %v212
      %v283 = vunpack.c.l.b16 %v213
      %v284 = vunpack.c.l.b16 %v214
      %v285 = vunpack.c.l.b16 %v215
      %v286 = vunpack.c.l.b16 %v216
      %v287 = vunpack.c.l.b16 %v217
      %v288 = vunpack.c.l.b16 %v218
      %v289 = vunpack.c.l.b16 %v219
      %v290 = vunpack.c.l.b16 %v220
      %v291 = vunpack.c.l.b16 %v221
      %v292 = vunpack.c.l.b16 %v222
      %v293 = vunpack.c.l.b16 %v223
      %v294 = vunpack.c.l.b16 %v224
      %v295 = vunpack.c.l.b16 %v225
      %v296 = vunpack.c.l.b16 %v226
      %v297 = vunpack.c.l.b16 %v227
      %v298 = vunpack.c.l.b16 %v228
      %v299 = vunpack.c.l.b16 %v229
      %v300 = vunpack.c.l.b16 %v230
      %v301 = vunpack.c.l.b16 %v231
      %v302 = vunpack.c.l.b16 %v232
      %v303 = vunpack.c.l.b16 %v233
      %v304 = vpack.c.b16 %v273, %v272
      %v305 = vpack.c.b16 %v275, %v274
      %v306 = vpack.c.b16 %v277, %v276
      %v307 = vpack.c.b16 %v279, %v278
      %v308 = vpack.c.b16 %v281, %v280
      %v309 = vpack.c.b16 %v283, %v282
      %v310 = vpack.c.b16 %v285, %v284
      %v311 = vpack.c.b16 %v287, %v286
      %v312 = vpack.c.b16 %v289, %v288
      %v313 = vpack.c.b16 %v291, %v290
      %v314 = vpack.c.b16 %v293, %v292
      %v315 = vpack.c.b16 %v295, %v294
      %v316 = vpack.c.b16 %v297, %v296
      %v317 = vpack.c.b16 %v299, %v298
      %v318 = vpack.c.b16 %v301, %v300
      %v319 = vpack.c.b16 %v303, %v302
      %v326 = vunpack.c.l.b16 %v234
      %v327 = vunpack.c.l.b16 %v235
      %v328 = vunpack.c.l.b16 %v236
      %v329 = vunpack.c.l.b16 %v237
      %v330 = vunpack.c.l.b16 %v238
      %v331 = vunpack.c.l.b16 %v239
      %v332 = vpack.c.b16 %v327, %v326
      %v333 = vpack.c.b16 %v329, %v328
      %v334 = vpack.c.b16 %v331, %v330
      %vm338 = vcmask 392192
      %v340 = vsel %vm338, %v304, 0
      %v343 = vsel %vm338, %v305, 0
      %v346 = vsel %vm338, %v306, 0
      %v349 = vsel %vm338, %v307, 0
      %v352 = vsel %vm338, %v308, 0
      %v355 = vsel %vm338, %v309, 0
      %v358 = vsel %vm338, %v310, 0
      %v361 = vsel %vm338, %v311, 0
      %v364 = vsel %vm338, %v312, 0
      %v367 = vsel %vm338, %v313, 0
      %v370 = vsel %vm338, %v314, 0
      %v373 = vsel %vm338, %v315, 0
      %v376 = vsel %vm338, %v316, 0
      %v379 = vsel %vm338, %v317, 0
      %v382 = vsel %vm338, %v318, 0
      %v385 = vsel %vm338, %v319, 0
      %387 = vmatpush.bf16.msra.mxu0 0
      %388 = vmatpush.bf16.msra.mxu0 0
      %389 = vmatpush.bf16.msra.mxu0 0
      %390 = vmatpush.bf16.msra.mxu0 0
      %391 = vmatpush.bf16.msra.mxu0 0
      %392 = vmatpush.bf16.msra.mxu0 %v334
      %393 = vmatpush.bf16.msra.mxu0 %v333
      %394 = vmatpush.bf16.msra.mxu0 %v332
      %395 = vmatmul.bf16.gmra.mxu0 %v340
      %v396 = vpop.f32.mrf.mxu0
      %v397 = vadd.f32 0.0, %v396
      %v398 = vpop.f32.mrf.mxu0
      %v399 = vadd.f32 0.0, %v398
      %400 = vmatmul.bf16.gmra.mxu0 %v343
      %v401 = vpop.f32.mrf.mxu0
      %v402 = vadd.f32 0.0, %v401
      %v403 = vpop.f32.mrf.mxu0
      %v404 = vadd.f32 0.0, %v403
      %405 = vmatmul.bf16.gmra.mxu0 %v346
      %v406 = vpop.f32.mrf.mxu0
      %v407 = vadd.f32 0.0, %v406
      %v408 = vpop.f32.mrf.mxu0
      %v409 = vadd.f32 0.0, %v408
      %410 = vmatmul.bf16.gmra.mxu0 %v349
      %v411 = vpop.f32.mrf.mxu0
      %v412 = vadd.f32 0.0, %v411
      %v413 = vpop.f32.mrf.mxu0
      %v414 = vadd.f32 0.0, %v413
      %415 = vmatmul.bf16.gmra.mxu0 %v352
      %v416 = vpop.f32.mrf.mxu0
      %v417 = vadd.f32 0.0, %v416
      %v418 = vpop.f32.mrf.mxu0
      %v419 = vadd.f32 0.0, %v418
      %420 = vmatmul.bf16.gmra.mxu0 %v355
      %v421 = vpop.f32.mrf.mxu0
      %v422 = vadd.f32 0.0, %v421
      %v423 = vpop.f32.mrf.mxu0
      %v424 = vadd.f32 0.0, %v423
      %425 = vmatmul.bf16.gmra.mxu0 %v358
      %v426 = vpop.f32.mrf.mxu0
      %v427 = vadd.f32 0.0, %v426
      %v428 = vpop.f32.mrf.mxu0
      %v429 = vadd.f32 0.0, %v428
      %430 = vmatmul.bf16.gmra.mxu0 %v361
      %v431 = vpop.f32.mrf.mxu0
      %v432 = vadd.f32 0.0, %v431
      %v433 = vpop.f32.mrf.mxu0
      %v434 = vadd.f32 0.0, %v433
      %435 = vmatmul.bf16.gmra.mxu0 %v364
      %v436 = vpop.f32.mrf.mxu0
      %v437 = vadd.f32 0.0, %v436
      %v438 = vpop.f32.mrf.mxu0
      %v439 = vadd.f32 0.0, %v438
      %440 = vmatmul.bf16.gmra.mxu0 %v367
      %v441 = vpop.f32.mrf.mxu0
      %v442 = vadd.f32 0.0, %v441
      %v443 = vpop.f32.mrf.mxu0
      %v444 = vadd.f32 0.0, %v443
      %445 = vmatmul.bf16.gmra.mxu0 %v370
      %v446 = vpop.f32.mrf.mxu0
      %v447 = vadd.f32 0.0, %v446
      %v448 = vpop.f32.mrf.mxu0
      %v449 = vadd.f32 0.0, %v448
      %450 = vmatmul.bf16.gmra.mxu0 %v373
      %v451 = vpop.f32.mrf.mxu0
      %v452 = vadd.f32 0.0, %v451
      %v453 = vpop.f32.mrf.mxu0
      %v454 = vadd.f32 0.0, %v453
      %455 = vmatmul.bf16.gmra.mxu0 %v376
      %v456 = vpop.f32.mrf.mxu0
      %v457 = vadd.f32 0.0, %v456
      %v458 = vpop.f32.mrf.mxu0
      %v459 = vadd.f32 0.0, %v458
      %460 = vmatmul.bf16.gmra.mxu0 %v379
      %v461 = vpop.f32.mrf.mxu0
      %v462 = vadd.f32 0.0, %v461
      %v463 = vpop.f32.mrf.mxu0
      %v464 = vadd.f32 0.0, %v463
      %465 = vmatmul.bf16.gmra.mxu0 %v382
      %v466 = vpop.f32.mrf.mxu0
      %v467 = vadd.f32 0.0, %v466
      %v468 = vpop.f32.mrf.mxu0
      %v469 = vadd.f32 0.0, %v468
      %470 = vmatmul.bf16.gmra.mxu0 %v385
      %v471 = vpop.f32.mrf.mxu0
      %v472 = vadd.f32 0.0, %v471
      %v473 = vpop.f32.mrf.mxu0
      %v474 = vadd.f32 0.0, %v473
      %475 = vdwg.mxu0
      %v476 = vld [vmem:[%s2] sm:$0x1]
      %v478 = vperm.slane %v476, 0
      %v480 = vmul.f32 %v397, %v478
      %v481 = vmul.f32 %v399, %v478
      %v482 = vmul.f32 %v402, %v478
      %v483 = vmul.f32 %v404, %v478
      %v484 = vmul.f32 %v407, %v478
      %v485 = vmul.f32 %v409, %v478
      %v486 = vmul.f32 %v412, %v478
      %v487 = vmul.f32 %v414, %v478
      %v488 = vmul.f32 %v417, %v478
      %v489 = vmul.f32 %v419, %v478
      %v490 = vmul.f32 %v422, %v478
      %v491 = vmul.f32 %v424, %v478
      %v492 = vmul.f32 %v427, %v478
      %v493 = vmul.f32 %v429, %v478
      %v494 = vmul.f32 %v432, %v478
      %v495 = vmul.f32 %v434, %v478
      %v496 = vmul.f32 %v437, %v478
      %v497 = vmul.f32 %v439, %v478
      %v498 = vmul.f32 %v442, %v478
      %v499 = vmul.f32 %v444, %v478
      %v500 = vmul.f32 %v447, %v478
      %v501 = vmul.f32 %v449, %v478
      %v502 = vmul.f32 %v452, %v478
      %v503 = vmul.f32 %v454, %v478
      %v504 = vmul.f32 %v457, %v478
      %v505 = vmul.f32 %v459, %v478
      %v506 = vmul.f32 %v462, %v478
      %v507 = vmul.f32 %v464, %v478
      %v508 = vmul.f32 %v467, %v478
      %v509 = vmul.f32 %v469, %v478
      %v510 = vmul.f32 %v472, %v478
      %v511 = vmul.f32 %v474, %v478
      %v512 = vld [vmem:[%s3] sm:$0x1]
      %v514 = vperm.slane %v512, 0
      %v516 = vadd.f32 %v480, %v514
      %v517 = vadd.f32 %v481, %v514
      %v518 = vadd.f32 %v482, %v514
      %v519 = vadd.f32 %v483, %v514
      %v520 = vadd.f32 %v484, %v514
      %v521 = vadd.f32 %v485, %v514
      %v522 = vadd.f32 %v486, %v514
      %v523 = vadd.f32 %v487, %v514
      %v524 = vadd.f32 %v488, %v514
      %v525 = vadd.f32 %v489, %v514
      %v526 = vadd.f32 %v490, %v514
      %v527 = vadd.f32 %v491, %v514
      %v528 = vadd.f32 %v492, %v514
      %v529 = vadd.f32 %v493, %v514
      %v530 = vadd.f32 %v494, %v514
      %v531 = vadd.f32 %v495, %v514
      %v532 = vadd.f32 %v496, %v514
      %v533 = vadd.f32 %v497, %v514
      %v534 = vadd.f32 %v498, %v514
      %v535 = vadd.f32 %v499, %v514
      %v536 = vadd.f32 %v500, %v514
      %v537 = vadd.f32 %v501, %v514
      %v538 = vadd.f32 %v502, %v514
      %v539 = vadd.f32 %v503, %v514
      %v540 = vadd.f32 %v504, %v514
      %v541 = vadd.f32 %v505, %v514
      %v542 = vadd.f32 %v506, %v514
      %v543 = vadd.f32 %v507, %v514
      %v544 = vadd.f32 %v508, %v514
      %v545 = vadd.f32 %v509, %v514
      %v546 = vadd.f32 %v510, %v514
      %v547 = vadd.f32 %v511, %v514
      %v548 = vmax.f32 %v516, 0.0
      %v549 = vmax.f32 %v517, 0.0
      %v550 = vmax.f32 %v518, 0.0
      %v551 = vmax.f32 %v519, 0.0
      %v552 = vmax.f32 %v520, 0.0
      %v553 = vmax.f32 %v521, 0.0
      %v554 = vmax.f32 %v522, 0.0
      %v555 = vmax.f32 %v523, 0.0
      %v556 = vmax.f32 %v524, 0.0
      %v557 = vmax.f32 %v525, 0.0
      %v558 = vmax.f32 %v526, 0.0
      %v559 = vmax.f32 %v527, 0.0
      %v560 = vmax.f32 %v528, 0.0
      %v561 = vmax.f32 %v529, 0.0
      %v562 = vmax.f32 %v530, 0.0
      %v563 = vmax.f32 %v531, 0.0
      %v564 = vmax.f32 %v532, 0.0
      %v565 = vmax.f32 %v533, 0.0
      %v566 = vmax.f32 %v534, 0.0
      %v567 = vmax.f32 %v535, 0.0
      %v568 = vmax.f32 %v536, 0.0
      %v569 = vmax.f32 %v537, 0.0
      %v570 = vmax.f32 %v538, 0.0
      %v571 = vmax.f32 %v539, 0.0
      %v572 = vmax.f32 %v540, 0.0
      %v573 = vmax.f32 %v541, 0.0
      %v574 = vmax.f32 %v542, 0.0
      %v575 = vmax.f32 %v543, 0.0
      %v576 = vmax.f32 %v544, 0.0
      %v577 = vmax.f32 %v545, 0.0
      %v578 = vmax.f32 %v546, 0.0
      %v579 = vmax.f32 %v547, 0.0
      %580 = vst [vmem:[%s199] sm:$0xff] %v548
      %581 = vst [vmem:[%s199 + $0x8] sm:$0xff] %v549
      %582 = vst [vmem:[%s199 + $0x10] sm:$0xff] %v550
      %583 = vst [vmem:[%s199 + $0x18] sm:$0xff] %v551
      %584 = vst [vmem:[%s199 + $0x20] sm:$0xff] %v552
      %585 = vst [vmem:[%s199 + $0x28] sm:$0xff] %v553
      %586 = vst [vmem:[%s199 + $0x30] sm:$0xff] %v554
      %587 = vst [vmem:[%s199 + $0x38] sm:$0xff] %v555
      %588 = vst [vmem:[%s199 + $0x40] sm:$0xff] %v556
      %589 = vst [vmem:[%s199 + $0x48] sm:$0xff] %v557
      %590 = vst [vmem:[%s199 + $0x50] sm:$0xff] %v558
      %591 = vst [vmem:[%s199 + $0x58] sm:$0xff] %v559
      %592 = vst [vmem:[%s199 + $0x60] sm:$0xff] %v560
      %593 = vst [vmem:[%s199 + $0x68] sm:$0xff] %v561
      %594 = vst [vmem:[%s199 + $0x70] sm:$0xff] %v562
      %595 = vst [vmem:[%s199 + $0x78] sm:$0xff] %v563
      %596 = vst [vmem:[%s199 + $0x80] sm:$0xff] %v564
      %597 = vst [vmem:[%s199 + $0x88] sm:$0xff] %v565
      %598 = vst [vmem:[%s199 + $0x90] sm:$0xff] %v566
      %599 = vst [vmem:[%s199 + $0x98] sm:$0xff] %v567
      %600 = vst [vmem:[%s199 + $0xa0] sm:$0xff] %v568
      %601 = vst [vmem:[%s199 + $0xa8] sm:$0xff] %v569
      %602 = vst [vmem:[%s199 + $0xb0] sm:$0xff] %v570
      %603 = vst [vmem:[%s199 + $0xb8] sm:$0xff] %v571
      %604 = vst [vmem:[%s199 + $0xc0] sm:$0xff] %v572
      %605 = vst [vmem:[%s199 + $0xc8] sm:$0xff] %v573
      %606 = vst [vmem:[%s199 + $0xd0] sm:$0xff] %v574
      %607 = vst [vmem:[%s199 + $0xd8] sm:$0xff] %v575
      %608 = vst [vmem:[%s199 + $0xe0] sm:$0xff] %v576
      %609 = vst [vmem:[%s199 + $0xe8] sm:$0xff] %v577
      %610 = vst [vmem:[%s199 + $0xf0] sm:$0xff] %v578
      %611 = vst [vmem:[%s199 + $0xf8] sm:$0xff] %v579
      %s612 = smul.u32 32, %s15
      %p613 = scmp.lt.s32.totalorder %s612, 63
      %s614 = scalar_select %p613, %s612, 63
      %s615 = smul.addr %s614, 8
      %s616 = scalar_lea.vmem %s4, %s615
      // Predicated region
      $region37: #{basic_block_forward.5} parent=35 // pred_check
        %p617 = pneg %p122
      $region38: #{basic_block_forward.5} parent=35 // pred_check_branch
        %619 = sbr.rel (%p617) target = $region40
      $region39: #{basic_block_forward.5} parent=35 // pred_region
        %s620 = smul.u32 32, %s15
      $region40: #{basic_block_forward.5} parent=35 // pred_fallthru
        _
    $region36: #{basic_block_forward.5} parent=5 // pred_fallthru
      _
    %p621 = scmp.le.s32.totalorder 2, %s10
    // Predicated region
    $region41: #{basic_block_forward.5} parent=5 // pred_check
      %p622 = pneg %p621
    $region42: #{basic_block_forward.5} parent=5 // pred_check_branch
      %624 = sbr.rel (%p622) target = $region44
    $region43: #{basic_block_forward.5} parent=5 // pred_region
      %s625 = ssub.s32 %s10, 2
      // Predicated region
      $region45: #{basic_block_forward.5} parent=43 // pred_check
        %p626 = pneg %p128
      $region46: #{basic_block_forward.5} parent=43 // pred_check_branch
        %628 = sbr.rel (%p626) target = $region48
      $region47: #{basic_block_forward.5} parent=43 // pred_region
        %s629 = smul.u32 32, %s16
        %p630 = scmp.lt.s32.totalorder %s629, 63
        %s631 = scalar_select %p630, %s629, 63
        %s632 = smul.addr %s631, 8
        %s633 = scalar_lea.vmem %s4, %s632
      $region48: #{basic_block_forward.5} parent=43 // pred_fallthru
        _
    $region44: #{basic_block_forward.5} parent=5 // pred_fallthru
      _
  $region6: #{basic_block_forward.5} parent=0 // loop_footer
    %s14 = sadd.s32 1, %s10
  $region7: #{basic_block_forward.5} parent=0 // loop_footer_branch
    %9 = sbr.rel target = $region3
  $region8: #{basic_block_forward.5} parent=0 // loop_exit
    _

// kernel: basic_block_forward.7
$region0: #{basic_block_forward.7}
  #allocation0 [shape = 'u32[]', space=smem, size = 0x4, offset = 0x4, fixed_abs, tag = 'smem constant byte address 0x4 - core index']
  #allocation1 [shape = 'u32[72,128]{1,0:T(1,128)}', space=vmem, size = 0x9000, scoped, tag = 'internal scratch']
  %s0 = inlined_call_operand.vmem [shape: bf16[512,48], index: 0, kind: input, shape index: {}]
  %s1 = inlined_call_operand.vmem [shape: bf16[48,128], index: 1, kind: input, shape index: {}]
  %s2 = inlined_call_operand.vmem [shape: f32[1,128], index: 2, kind: input, shape index: {}]
  %s3 = inlined_call_operand.vmem [shape: f32[1,128], index: 3, kind: input, shape index: {}]
  %s4 = inlined_call_operand.vmem [shape: f32[512,128], index: 4, kind: input, shape index: {}]
  %s5 = inlined_call_operand.vmem [shape: f32[512,128], index: 5, kind: output, shape index: {}]
  %s6 = sld [smem:[#allocation0]]
  $region53: #{basic_block_forward.7} parent=0
    _
  %s8 = ssub.s32 1, %s6
  %s9 = scalar_select 0, %s8, %s6
  loop: start=0, step=1, limit=4
  $region2: #{basic_block_forward.7} parent=0 // loop_pre_header
    _
  $region3: #{basic_block_forward.7} parent=0 // loop_header
    %s11 = sphi 0, %s15
    %p12 = scmp.ge.s32.totalorder %s11, 4
    %s21 = sphi 0, %s23
    %s24 = sphi 0, %s21
    %s25 = sphi 0, %s24
    %s41 = sphi 0, %s25
    %s45 = sphi 0, %s45
    %s47 = sphi 0, %s45
    %s48 = sphi 0, %s47
    %s62 = sphi 0, %s48
    %s66 = sphi 0, %s66
    %s68 = sphi 0, %s66
    %s69 = sphi 0, %s68
    %s83 = sphi 0, %s69
    %s87 = sphi 0, %s87
    %s89 = sphi 0, %s87
    %s90 = sphi 0, %s89
    %s104 = sphi 0, %s90
    %s110 = sphi 0, %s112
    %s113 = sphi 0, %s110
    %s114 = sphi 0, %s113
    %s130 = sphi 0, %s114
    %s136 = sphi 0, %s138
    %s139 = sphi 0, %s136
    %s140 = sphi 0, %s139
    %s156 = sphi 0, %s140
  $region4: #{basic_block_forward.7} parent=0 // loop_header_branch
    %14 = sbr.rel (%p12) target = $region8
  $region5: #{basic_block_forward.7} parent=0 // loop_body
    %s16 = ssub.s32 %s11, 1
    %s17 = ssub.s32 %s11, 2
    %s18 = sadd.s32 %s11, 1
    %s19 = ssub.s32 %s11, %s18
    %p20 = scmp.eq.s32.totalorder %s19, 0
    %s22 = sadd.s32 %s21, 1
    %s23 = scalar_select %p20, %s21, %s22
    %p26 = pneg %p20
    %p27 = scmp.eq.s32.totalorder %s11, 1
    %p28 = por %p26, %p27
    %p29 = scmp.ne.s32.totalorder %s21, %s24
    %p30 = scmp.eq.s32.totalorder %s11, 0
    %p31 = por %p29, %p30
    %p32 = scmp.ne.s32.totalorder %s21, %s24
    %p33 = scmp.eq.s32.totalorder %s16, 1
    %p34 = por %p32, %p33
    %p35 = scmp.ne.s32.totalorder %s24, %s25
    %p36 = scmp.eq.s32.totalorder %s16, 0
    %p37 = por %p35, %p36
    %p38 = scmp.ne.s32.totalorder %s24, %s25
    %p39 = scmp.eq.s32.totalorder %s17, 1
    %p40 = por %p38, %p39
    %p42 = scmp.ne.s32.totalorder %s25, %s41
    %p43 = scmp.eq.s32.totalorder %s17, 0
    %p44 = por %p42, %p43
    %s46 = sadd.s32 %s45, 1
    %p49 = scmp.eq.s32.totalorder %s11, 1
    %p50 = scmp.ne.s32.totalorder %s45, %s47
    %p51 = scmp.eq.s32.totalorder %s11, 0
    %p52 = por %p50, %p51
    %p53 = scmp.ne.s32.totalorder %s45, %s47
    %p54 = scmp.eq.s32.totalorder %s16, 1
    %p55 = por %p53, %p54
    %p56 = scmp.ne.s32.totalorder %s47, %s48
    %p57 = scmp.eq.s32.totalorder %s16, 0
    %p58 = por %p56, %p57
    %p59 = scmp.ne.s32.totalorder %s47, %s48
    %p60 = scmp.eq.s32.totalorder %s17, 1
    %p61 = por %p59, %p60
    %p63 = scmp.ne.s32.totalorder %s48, %s62
    %p64 = scmp.eq.s32.totalorder %s17, 0
    %p65 = por %p63, %p64
    %s67 = sadd.s32 %s66, 1
    %p70 = scmp.eq.s32.totalorder %s11, 1
    %p71 = scmp.ne.s32.totalorder %s66, %s68
    %p72 = scmp.eq.s32.totalorder %s11, 0
    %p73 = por %p71, %p72
    %p74 = scmp.ne.s32.totalorder %s66, %s68
    %p75 = scmp.eq.s32.totalorder %s16, 1
    %p76 = por %p74, %p75
    %p77 = scmp.ne.s32.totalorder %s68, %s69
    %p78 = scmp.eq.s32.totalorder %s16, 0
    %p79 = por %p77, %p78
    %p80 = scmp.ne.s32.totalorder %s68, %s69
    %p81 = scmp.eq.s32.totalorder %s17, 1
    %p82 = por %p80, %p81
    %p84 = scmp.ne.s32.totalorder %s69, %s83
    %p85 = scmp.eq.s32.totalorder %s17, 0
    %p86 = por %p84, %p85
    %s88 = sadd.s32 %s87, 1
    %p91 = scmp.eq.s32.totalorder %s11, 1
    %p92 = scmp.ne.s32.totalorder %s87, %s89
    %p93 = scmp.eq.s32.totalorder %s11, 0
    %p94 = por %p92, %p93
    %p95 = scmp.ne.s32.totalorder %s87, %s89
    %p96 = scmp.eq.s32.totalorder %s16, 1
    %p97 = por %p95, %p96
    %p98 = scmp.ne.s32.totalorder %s89, %s90
    %p99 = scmp.eq.s32.totalorder %s16, 0
    %p100 = por %p98, %p99
    %p101 = scmp.ne.s32.totalorder %s89, %s90
    %p102 = scmp.eq.s32.totalorder %s17, 1
    %p103 = por %p101, %p102
    %p105 = scmp.ne.s32.totalorder %s90, %s104
    %p106 = scmp.eq.s32.totalorder %s17, 0
    %p107 = por %p105, %p106
    %s108 = ssub.s32 %s11, %s18
    %p109 = scmp.eq.s32.totalorder %s108, 0
    %s111 = sadd.s32 %s110, 1
    %s112 = scalar_select %p109, %s110, %s111
    %p115 = pneg %p109
    %p116 = scmp.eq.s32.totalorder %s11, 1
    %p117 = por %p115, %p116
    %p118 = scmp.ne.s32.totalorder %s110, %s113
    %p119 = scmp.eq.s32.totalorder %s11, 0
    %p120 = por %p118, %p119
    %p121 = scmp.ne.s32.totalorder %s110, %s113
    %p122 = scmp.eq.s32.totalorder %s16, 1
    %p123 = por %p121, %p122
    %p124 = scmp.ne.s32.totalorder %s113, %s114
    %p125 = scmp.eq.s32.totalorder %s16, 0
    %p126 = por %p124, %p125
    %p127 = scmp.ne.s32.totalorder %s113, %s114
    %p128 = scmp.eq.s32.totalorder %s17, 1
    %p129 = por %p127, %p128
    %p131 = scmp.ne.s32.totalorder %s114, %s130
    %p132 = scmp.eq.s32.totalorder %s17, 0
    %p133 = por %p131, %p132
    %s134 = ssub.s32 %s11, %s18
    %p135 = scmp.eq.s32.totalorder %s134, 0
    %s137 = sadd.s32 %s136, 1
    %s138 = scalar_select %p135, %s136, %s137
    %p141 = pneg %p135
    %p142 = scmp.eq.s32.totalorder %s11, 1
    %p143 = por %p141, %p142
    %p144 = scmp.ne.s32.totalorder %s136, %s139
    %p145 = scmp.eq.s32.totalorder %s11, 0
    %p146 = por %p144, %p145
    %p147 = scmp.ne.s32.totalorder %s136, %s139
    %p148 = scmp.eq.s32.totalorder %s16, 1
    %p149 = por %p147, %p148
    %p150 = scmp.ne.s32.totalorder %s139, %s140
    %p151 = scmp.eq.s32.totalorder %s16, 0
    %p152 = por %p150, %p151
    %p153 = scmp.ne.s32.totalorder %s139, %s140
    %p154 = scmp.eq.s32.totalorder %s17, 1
    %p155 = por %p153, %p154
    %p157 = scmp.ne.s32.totalorder %s140, %s156
    %p158 = scmp.eq.s32.totalorder %s17, 0
    %p159 = por %p157, %p158
    %p160 = scmp.le.s32.totalorder 1, %s11
    %p161 = scmp.lt.s32.totalorder %s11, 3
    %p162 = pnand %p160, %p161
    %p163 = pneg %p162
    // Predicated region
    $region9: #{basic_block_forward.7} parent=5 // pred_check
      _
    $region10: #{basic_block_forward.7} parent=5 // pred_check_branch
      %165 = sbr.rel (%p162) target = $region12
    $region11: #{basic_block_forward.7} parent=5 // pred_region
      %s166 = ssub.s32 %s11, 1
      // Predicated region
      $region13: #{basic_block_forward.7} parent=11 // pred_check
        %p167 = pneg %p58
      $region14: #{basic_block_forward.7} parent=11 // pred_check_branch
        %169 = sbr.rel (%p167) target = $region16
      $region15: #{basic_block_forward.7} parent=11 // pred_region
        _
      $region16: #{basic_block_forward.7} parent=11 // pred_fallthru
        _
      // Predicated region
      $region17: #{basic_block_forward.7} parent=11 // pred_check
        %p170 = pneg %p79
      $region18: #{basic_block_forward.7} parent=11 // pred_check_branch
        %172 = sbr.rel (%p170) target = $region20
      $region19: #{basic_block_forward.7} parent=11 // pred_region
        _
      $region20: #{basic_block_forward.7} parent=11 // pred_fallthru
        _
      // Predicated region
      $region21: #{basic_block_forward.7} parent=11 // pred_check
        %p173 = pneg %p100
      $region22: #{basic_block_forward.7} parent=11 // pred_check_branch
        %175 = sbr.rel (%p173) target = $region24
      $region23: #{basic_block_forward.7} parent=11 // pred_region
        _
      $region24: #{basic_block_forward.7} parent=11 // pred_fallthru
        _
    $region12: #{basic_block_forward.7} parent=5 // pred_fallthru
      _
    %p176 = scmp.lt.s32.totalorder %s11, 2
    // Predicated region
    $region25: #{basic_block_forward.7} parent=5 // pred_check
      %p177 = pneg %p176
    $region26: #{basic_block_forward.7} parent=5 // pred_check_branch
      %179 = sbr.rel (%p177) target = $region28
    $region27: #{basic_block_forward.7} parent=5 // pred_region
      // Predicated region
      $region29: #{basic_block_forward.7} parent=27 // pred_check
        %p180 = pneg %p31
      $region30: #{basic_block_forward.7} parent=27 // pred_check_branch
        %182 = sbr.rel (%p180) target = $region32
      $region31: #{basic_block_forward.7} parent=27 // pred_region
        %s183 = smul.u32 32, %s11
        %p184 = scmp.lt.s32.totalorder %s183, 63
        %s185 = scalar_select %p184, %s183, 63
        %s186 = smul.addr %s185, 4
        %s187 = scalar_lea.vmem %s0, %s186
        %s188 = smul.u32 32, %s11
      $region32: #{basic_block_forward.7} parent=27 // pred_fallthru
        _
      // Predicated region
      $region33: #{basic_block_forward.7} parent=27 // pred_check
        %p189 = pneg %p120
      $region34: #{basic_block_forward.7} parent=27 // pred_check_branch
        %191 = sbr.rel (%p189) target = $region36
      $region35: #{basic_block_forward.7} parent=27 // pred_region
        %s192 = smul.u32 32, %s11
        %p193 = scmp.lt.s32.totalorder %s192, 63
        %s194 = scalar_select %p193, %s192, 63
        %s195 = smul.addr %s194, 8
        %s196 = scalar_lea.vmem %s4, %s195
        %s197 = smul.u32 32, %s11
      $region36: #{basic_block_forward.7} parent=27 // pred_fallthru
        _
    $region28: #{basic_block_forward.7} parent=5 // pred_fallthru
      _
    %p198 = scmp.le.s32.totalorder 1, %s11
    %p199 = scmp.lt.s32.totalorder %s11, 3
    %p200 = pnand %p198, %p199
    %p201 = pneg %p200
    // Predicated region
    $region37: #{basic_block_forward.7} parent=5 // pred_check
      _
    $region38: #{basic_block_forward.7} parent=5 // pred_check_branch
      %203 = sbr.rel (%p200) target = $region40
    $region39: #{basic_block_forward.7} parent=5 // pred_region
      %s204 = ssub.s32 %s11, 1
      %s205 = smul.u32 32, %s16
      %p206 = scmp.lt.s32.totalorder %s205, 63
      %s207 = scalar_select %p206, %s205, 63
      %s208 = smul.addr %s207, 4
      %s209 = scalar_lea.vmem %s0, %s208
      %p210 = pneg %p37
      %p211 = pneg %p34
      %p212 = pneg %p58
      %p213 = pneg %p55
      %p214 = pneg %p79
      %p215 = pneg %p76
      %p216 = pneg %p100
      %p217 = pneg %p97
      %s218 = smul.u32 32, %s16
      %p219 = scmp.lt.s32.totalorder %s218, 63
      %s220 = scalar_select %p219, %s218, 63
      %s221 = smul.addr %s220, 8
      %s222 = scalar_lea.vmem %s4, %s221
      %p223 = pneg %p126
      %p224 = pneg %p123
      %p225 = pneg %p152
      %p226 = pneg %p149
      %s227 = smul.u32 32, %s16
      %p228 = scmp.lt.s32.totalorder %s227, 63
      %s229 = scalar_select %p228, %s227, 63
      %s230 = smul.addr %s229, 8
      %s231 = scalar_lea.vmem %s5, %s230
      %s232 = smul.u32 32, %s16
      %p233 = scmp.lt.s32.totalorder %s232, 63
      %s234 = scalar_select %p233, %s232, 63
      %s235 = smul.addr %s234, 4
      %s236 = scalar_lea.vmem %s0, %s235
      %s237 = smul.u32 32, %s16
      %s238 = smul.u32 32, %s16
      %p239 = scmp.lt.s32.totalorder %s238, 63
      %s240 = scalar_select %p239, %s238, 63
      %s241 = smul.addr %s240, 8
      %s242 = scalar_lea.vmem %s4, %s241
      %s243 = smul.u32 32, %s16
      %s244 = smul.u32 32, %s16
      %p245 = scmp.lt.s32.totalorder %s244, 63
      %s246 = scalar_select %p245, %s244, 63
      %s247 = smul.addr %s246, 8
      %s248 = scalar_lea.vmem %s5, %s247
      %s249 = smul.u32 32, %s16
      %v251 = vld [vmem:[%s236] sm:$0xf]
      %v252 = vld [vmem:[%s236 + $0x4] sm:$0xf]
      %v253 = vld [vmem:[%s236 + $0x8] sm:$0xf]
      %v254 = vld [vmem:[%s236 + $0xc] sm:$0xf]
      %v255 = vld [vmem:[%s236 + $0x10] sm:$0xf]
      %v256 = vld [vmem:[%s236 + $0x14] sm:$0xf]
      %v257 = vld [vmem:[%s236 + $0x18] sm:$0xf]
      %v258 = vld [vmem:[%s236 + $0x1c] sm:$0xf]
      %v259 = vld [vmem:[%s236 + $0x20] sm:$0xf]
      %v260 = vld [vmem:[%s236 + $0x24] sm:$0xf]
      %v261 = vld [vmem:[%s236 + $0x28] sm:$0xf]
      %v262 = vld [vmem:[%s236 + $0x2c] sm:$0xf]
      %v263 = vld [vmem:[%s236 + $0x30] sm:$0xf]
      %v264 = vld [vmem:[%s236 + $0x34] sm:$0xf]
      %v265 = vld [vmem:[%s236 + $0x38] sm:$0xf]
      %v266 = vld [vmem:[%s236 + $0x3c] sm:$0xf]
      %v267 = vld [vmem:[%s236 + $0x40] sm:$0xf]
      %v268 = vld [vmem:[%s236 + $0x44] sm:$0xf]
      %v269 = vld [vmem:[%s236 + $0x48] sm:$0xf]
      %v270 = vld [vmem:[%s236 + $0x4c] sm:$0xf]
      %v271 = vld [vmem:[%s236 + $0x50] sm:$0xf]
      %v272 = vld [vmem:[%s236 + $0x54] sm:$0xf]
      %v273 = vld [vmem:[%s236 + $0x58] sm:$0xf]
      %v274 = vld [vmem:[%s236 + $0x5c] sm:$0xf]
      %v275 = vld [vmem:[%s236 + $0x60] sm:$0xf]
      %v276 = vld [vmem:[%s236 + $0x64] sm:$0xf]
      %v277 = vld [vmem:[%s236 + $0x68] sm:$0xf]
      %v278 = vld [vmem:[%s236 + $0x6c] sm:$0xf]
      %v279 = vld [vmem:[%s236 + $0x70] sm:$0xf]
      %v280 = vld [vmem:[%s236 + $0x74] sm:$0xf]
      %v281 = vld [vmem:[%s236 + $0x78] sm:$0xf]
      %v282 = vld [vmem:[%s236 + $0x7c] sm:$0xf]
      %v283 = vld [vmem:[%s1] sm:$0xf]
      %v284 = vld [vmem:[%s1 + $0x4] sm:$0xf]
      %v285 = vld [vmem:[%s1 + $0x8] sm:$0xf]
      %v286 = vld [vmem:[%s1 + $0xc] sm:$0xf]
      %v287 = vld [vmem:[%s1 + $0x10] sm:$0xf]
      %v288 = vld [vmem:[%s1 + $0x14] sm:$0xf]
      %v321 = vunpack.c.l.b16 %v251
      %v322 = vunpack.c.l.b16 %v252
      %v323 = vunpack.c.l.b16 %v253
      %v324 = vunpack.c.l.b16 %v254
      %v325 = vunpack.c.l.b16 %v255
      %v326 = vunpack.c.l.b16 %v256
      %v327 = vunpack.c.l.b16 %v257
      %v328 = vunpack.c.l.b16 %v258
      %v329 = vunpack.c.l.b16 %v259
      %v330 = vunpack.c.l.b16 %v260
      %v331 = vunpack.c.l.b16 %v261
      %v332 = vunpack.c.l.b16 %v262
      %v333 = vunpack.c.l.b16 %v263
      %v334 = vunpack.c.l.b16 %v264
      %v335 = vunpack.c.l.b16 %v265
      %v336 = vunpack.c.l.b16 %v266
      %v337 = vunpack.c.l.b16 %v267
      %v338 = vunpack.c.l.b16 %v268
      %v339 = vunpack.c.l.b16 %v269
      %v340 = vunpack.c.l.b16 %v270
      %v341 = vunpack.c.l.b16 %v271
      %v342 = vunpack.c.l.b16 %v272
      %v343 = vunpack.c.l.b16 %v273
      %v344 = vunpack.c.l.b16 %v274
      %v345 = vunpack.c.l.b16 %v275
      %v346 = vunpack.c.l.b16 %v276
      %v347 = vunpack.c.l.b16 %v277
      %v348 = vunpack.c.l.b16 %v278
      %v349 = vunpack.c.l.b16 %v279
      %v350 = vunpack.c.l.b16 %v280
      %v351 = vunpack.c.l.b16 %v281
      %v352 = vunpack.c.l.b16 %v282
      %v353 = vpack.c.b16 %v322, %v321
      %v354 = vpack.c.b16 %v324, %v323
      %v355 = vpack.c.b16 %v326, %v325
      %v356 = vpack.c.b16 %v328, %v327
      %v357 = vpack.c.b16 %v330, %v329
      %v358 = vpack.c.b16 %v332, %v331
      %v359 = vpack.c.b16 %v334, %v333
      %v360 = vpack.c.b16 %v336, %v335
      %v361 = vpack.c.b16 %v338, %v337
      %v362 = vpack.c.b16 %v340, %v339
      %v363 = vpack.c.b16 %v342, %v341
      %v364 = vpack.c.b16 %v344, %v343
      %v365 = vpack.c.b16 %v346, %v345
      %v366 = vpack.c.b16 %v348, %v347
      %v367 = vpack.c.b16 %v350, %v349
      %v368 = vpack.c.b16 %v352, %v351
      %v375 = vunpack.c.l.b16 %v283
      %v376 = vunpack.c.l.b16 %v284
      %v377 = vunpack.c.l.b16 %v285
      %v378 = vunpack.c.l.b16 %v286
      %v379 = vunpack.c.l.b16 %v287
      %v380 = vunpack.c.l.b16 %v288
      %v381 = vpack.c.b16 %v376, %v375
      %v382 = vpack.c.b16 %v378, %v377
      %v383 = vpack.c.b16 %v380, %v379
      %vm387 = vcmask 392192
      %v389 = vsel %vm387, %v353, 0
      %v392 = vsel %vm387, %v354, 0
      %v395 = vsel %vm387, %v355, 0
      %v398 = vsel %vm387, %v356, 0
      %v401 = vsel %vm387, %v357, 0
      %v404 = vsel %vm387, %v358, 0
      %v407 = vsel %vm387, %v359, 0
      %v410 = vsel %vm387, %v360, 0
      %v413 = vsel %vm387, %v361, 0
      %v416 = vsel %vm387, %v362, 0
      %v419 = vsel %vm387, %v363, 0
      %v422 = vsel %vm387, %v364, 0
      %v425 = vsel %vm387, %v365, 0
      %v428 = vsel %vm387, %v366, 0
      %v431 = vsel %vm387, %v367, 0
      %v434 = vsel %vm387, %v368, 0
      %436 = vmatpush.bf16.msra.mxu0 0
      %437 = vmatpush.bf16.msra.mxu0 0
      %438 = vmatpush.bf16.msra.mxu0 0
      %439 = vmatpush.bf16.msra.mxu0 0
      %440 = vmatpush.bf16.msra.mxu0 0
      %441 = vmatpush.bf16.msra.mxu0 %v383
      %442 = vmatpush.bf16.msra.mxu0 %v382
      %443 = vmatpush.bf16.msra.mxu0 %v381
      %444 = vmatmul.bf16.gmra.mxu0 %v389
      %v445 = vpop.f32.mrf.mxu0
      %v446 = vadd.f32 0.0, %v445
      %v447 = vpop.f32.mrf.mxu0
      %v448 = vadd.f32 0.0, %v447
      %449 = vmatmul.bf16.gmra.mxu0 %v392
      %v450 = vpop.f32.mrf.mxu0
      %v451 = vadd.f32 0.0, %v450
      %v452 = vpop.f32.mrf.mxu0
      %v453 = vadd.f32 0.0, %v452
      %454 = vmatmul.bf16.gmra.mxu0 %v395
      %v455 = vpop.f32.mrf.mxu0
      %v456 = vadd.f32 0.0, %v455
      %v457 = vpop.f32.mrf.mxu0
      %v458 = vadd.f32 0.0, %v457
      %459 = vmatmul.bf16.gmra.mxu0 %v398
      %v460 = vpop.f32.mrf.mxu0
      %v461 = vadd.f32 0.0, %v460
      %v462 = vpop.f32.mrf.mxu0
      %v463 = vadd.f32 0.0, %v462
      %464 = vmatmul.bf16.gmra.mxu0 %v401
      %v465 = vpop.f32.mrf.mxu0
      %v466 = vadd.f32 0.0, %v465
      %v467 = vpop.f32.mrf.mxu0
      %v468 = vadd.f32 0.0, %v467
      %469 = vmatmul.bf16.gmra.mxu0 %v404
      %v470 = vpop.f32.mrf.mxu0
      %v471 = vadd.f32 0.0, %v470
      %v472 = vpop.f32.mrf.mxu0
      %v473 = vadd.f32 0.0, %v472
      %474 = vmatmul.bf16.gmra.mxu0 %v407
      %v475 = vpop.f32.mrf.mxu0
      %v476 = vadd.f32 0.0, %v475
      %v477 = vpop.f32.mrf.mxu0
      %v478 = vadd.f32 0.0, %v477
      %479 = vmatmul.bf16.gmra.mxu0 %v410
      %v480 = vpop.f32.mrf.mxu0
      %v481 = vadd.f32 0.0, %v480
      %v482 = vpop.f32.mrf.mxu0
      %v483 = vadd.f32 0.0, %v482
      %484 = vmatmul.bf16.gmra.mxu0 %v413
      %v485 = vpop.f32.mrf.mxu0
      %v486 = vadd.f32 0.0, %v485
      %v487 = vpop.f32.mrf.mxu0
      %v488 = vadd.f32 0.0, %v487
      %489 = vmatmul.bf16.gmra.mxu0 %v416
      %v490 = vpop.f32.mrf.mxu0
      %v491 = vadd.f32 0.0, %v490
      %v492 = vpop.f32.mrf.mxu0
      %v493 = vadd.f32 0.0, %v492
      %494 = vmatmul.bf16.gmra.mxu0 %v419
      %v495 = vpop.f32.mrf.mxu0
      %v496 = vadd.f32 0.0, %v495
      %v497 = vpop.f32.mrf.mxu0
      %v498 = vadd.f32 0.0, %v497
      %499 = vmatmul.bf16.gmra.mxu0 %v422
      %v500 = vpop.f32.mrf.mxu0
      %v501 = vadd.f32 0.0, %v500
      %v502 = vpop.f32.mrf.mxu0
      %v503 = vadd.f32 0.0, %v502
      %504 = vmatmul.bf16.gmra.mxu0 %v425
      %v505 = vpop.f32.mrf.mxu0
      %v506 = vadd.f32 0.0, %v505
      %v507 = vpop.f32.mrf.mxu0
      %v508 = vadd.f32 0.0, %v507
      %509 = vmatmul.bf16.gmra.mxu0 %v428
      %v510 = vpop.f32.mrf.mxu0
      %v511 = vadd.f32 0.0, %v510
      %v512 = vpop.f32.mrf.mxu0
      %v513 = vadd.f32 0.0, %v512
      %514 = vmatmul.bf16.gmra.mxu0 %v431
      %v515 = vpop.f32.mrf.mxu0
      %v516 = vadd.f32 0.0, %v515
      %v517 = vpop.f32.mrf.mxu0
      %v518 = vadd.f32 0.0, %v517
      %519 = vmatmul.bf16.gmra.mxu0 %v434
      %v520 = vpop.f32.mrf.mxu0
      %v521 = vadd.f32 0.0, %v520
      %v522 = vpop.f32.mrf.mxu0
      %v523 = vadd.f32 0.0, %v522
      %524 = vdwg.mxu0
      %v525 = vld [vmem:[%s2] sm:$0x1]
      %v527 = vperm.slane %v525, 0
      %v529 = vmul.f32 %v446, %v527
      %v530 = vmul.f32 %v448, %v527
      %v531 = vmul.f32 %v451, %v527
      %v532 = vmul.f32 %v453, %v527
      %v533 = vmul.f32 %v456, %v527
      %v534 = vmul.f32 %v458, %v527
      %v535 = vmul.f32 %v461, %v527
      %v536 = vmul.f32 %v463, %v527
      %v537 = vmul.f32 %v466, %v527
      %v538 = vmul.f32 %v468, %v527
      %v539 = vmul.f32 %v471, %v527
      %v540 = vmul.f32 %v473, %v527
      %v541 = vmul.f32 %v476, %v527
      %v542 = vmul.f32 %v478, %v527
      %v543 = vmul.f32 %v481, %v527
      %v544 = vmul.f32 %v483, %v527
      %v545 = vmul.f32 %v486, %v527
      %v546 = vmul.f32 %v488, %v527
      %v547 = vmul.f32 %v491, %v527
      %v548 = vmul.f32 %v493, %v527
      %v549 = vmul.f32 %v496, %v527
      %v550 = vmul.f32 %v498, %v527
      %v551 = vmul.f32 %v501, %v527
      %v552 = vmul.f32 %v503, %v527
      %v553 = vmul.f32 %v506, %v527
      %v554 = vmul.f32 %v508, %v527
      %v555 = vmul.f32 %v511, %v527
      %v556 = vmul.f32 %v513, %v527
      %v557 = vmul.f32 %v516, %v527
      %v558 = vmul.f32 %v518, %v527
      %v559 = vmul.f32 %v521, %v527
      %v560 = vmul.f32 %v523, %v527
      %v561 = vld [vmem:[%s3] sm:$0x1]
      %v563 = vperm.slane %v561, 0
      %v565 = vadd.f32 %v529, %v563
      %v566 = vadd.f32 %v530, %v563
      %v567 = vadd.f32 %v531, %v563
      %v568 = vadd.f32 %v532, %v563
      %v569 = vadd.f32 %v533, %v563
      %v570 = vadd.f32 %v534, %v563
      %v571 = vadd.f32 %v535, %v563
      %v572 = vadd.f32 %v536, %v563
      %v573 = vadd.f32 %v537, %v563
      %v574 = vadd.f32 %v538, %v563
      %v575 = vadd.f32 %v539, %v563
      %v576 = vadd.f32 %v540, %v563
      %v577 = vadd.f32 %v541, %v563
      %v578 = vadd.f32 %v542, %v563
      %v579 = vadd.f32 %v543, %v563
      %v580 = vadd.f32 %v544, %v563
      %v581 = vadd.f32 %v545, %v563
      %v582 = vadd.f32 %v546, %v563
      %v583 = vadd.f32 %v547, %v563
      %v584 = vadd.f32 %v548, %v563
      %v585 = vadd.f32 %v549, %v563
      %v586 = vadd.f32 %v550, %v563
      %v587 = vadd.f32 %v551, %v563
      %v588 = vadd.f32 %v552, %v563
      %v589 = vadd.f32 %v553, %v563
      %v590 = vadd.f32 %v554, %v563
      %v591 = vadd.f32 %v555, %v563
      %v592 = vadd.f32 %v556, %v563
      %v593 = vadd.f32 %v557, %v563
      %v594 = vadd.f32 %v558, %v563
      %v595 = vadd.f32 %v559, %v563
      %v596 = vadd.f32 %v560, %v563
      %v597 = vld [vmem:[%s242] sm:$0xff]
      %v598 = vld [vmem:[%s242 + $0x8] sm:$0xff]
      %v599 = vld [vmem:[%s242 + $0x10] sm:$0xff]
      %v600 = vld [vmem:[%s242 + $0x18] sm:$0xff]
      %v601 = vld [vmem:[%s242 + $0x20] sm:$0xff]
      %v602 = vld [vmem:[%s242 + $0x28] sm:$0xff]
      %v603 = vld [vmem:[%s242 + $0x30] sm:$0xff]
      %v604 = vld [vmem:[%s242 + $0x38] sm:$0xff]
      %v605 = vld [vmem:[%s242 + $0x40] sm:$0xff]
      %v606 = vld [vmem:[%s242 + $0x48] sm:$0xff]
      %v607 = vld [vmem:[%s242 + $0x50] sm:$0xff]
      %v608 = vld [vmem:[%s242 + $0x58] sm:$0xff]
      %v609 = vld [vmem:[%s242 + $0x60] sm:$0xff]
      %v610 = vld [vmem:[%s242 + $0x68] sm:$0xff]
      %v611 = vld [vmem:[%s242 + $0x70] sm:$0xff]
      %v612 = vld [vmem:[%s242 + $0x78] sm:$0xff]
      %v613 = vld [vmem:[%s242 + $0x80] sm:$0xff]
      %v614 = vld [vmem:[%s242 + $0x88] sm:$0xff]
      %v615 = vld [vmem:[%s242 + $0x90] sm:$0xff]
      %v616 = vld [vmem:[%s242 + $0x98] sm:$0xff]
      %v617 = vld [vmem:[%s242 + $0xa0] sm:$0xff]
      %v618 = vld [vmem:[%s242 + $0xa8] sm:$0xff]
      %v619 = vld [vmem:[%s242 + $0xb0] sm:$0xff]
      %v620 = vld [vmem:[%s242 + $0xb8] sm:$0xff]
      %v621 = vld [vmem:[%s242 + $0xc0] sm:$0xff]
      %v622 = vld [vmem:[%s242 + $0xc8] sm:$0xff]
      %v623 = vld [vmem:[%s242 + $0xd0] sm:$0xff]
      %v624 = vld [vmem:[%s242 + $0xd8] sm:$0xff]
      %v625 = vld [vmem:[%s242 + $0xe0] sm:$0xff]
      %v626 = vld [vmem:[%s242 + $0xe8] sm:$0xff]
      %v627 = vld [vmem:[%s242 + $0xf0] sm:$0xff]
      %v628 = vld [vmem:[%s242 + $0xf8] sm:$0xff]
      %v629 = vadd.f32 %v565, %v597
      %v630 = vadd.f32 %v566, %v598
      %v631 = vadd.f32 %v567, %v599
      %v632 = vadd.f32 %v568, %v600
      %v633 = vadd.f32 %v569, %v601
      %v634 = vadd.f32 %v570, %v602
      %v635 = vadd.f32 %v571, %v603
      %v636 = vadd.f32 %v572, %v604
      %v637 = vadd.f32 %v573, %v605
      %v638 = vadd.f32 %v574, %v606
      %v639 = vadd.f32 %v575, %v607
      %v640 = vadd.f32 %v576, %v608
      %v641 = vadd.f32 %v577, %v609
      %v642 = vadd.f32 %v578, %v610
      %v643 = vadd.f32 %v579, %v611
      %v644 = vadd.f32 %v580, %v612
      %v645 = vadd.f32 %v581, %v613
      %v646 = vadd.f32 %v582, %v614
      %v647 = vadd.f32 %v583, %v615
      %v648 = vadd.f32 %v584, %v616
      %v649 = vadd.f32 %v585, %v617
      %v650 = vadd.f32 %v586, %v618
      %v651 = vadd.f32 %v587, %v619
      %v652 = vadd.f32 %v588, %v620
      %v653 = vadd.f32 %v589, %v621
      %v654 = vadd.f32 %v590, %v622
      %v655 = vadd.f32 %v591, %v623
      %v656 = vadd.f32 %v592, %v624
      %v657 = vadd.f32 %v593, %v625
      %v658 = vadd.f32 %v594, %v626
      %v659 = vadd.f32 %v595, %v627
      %v660 = vadd.f32 %v596, %v628
      %v661 = vmax.f32 %v629, 0.0
      %v662 = vmax.f32 %v630, 0.0
      %v663 = vmax.f32 %v631, 0.0
      %v664 = vmax.f32 %v632, 0.0
      %v665 = vmax.f32 %v633, 0.0
      %v666 = vmax.f32 %v634, 0.0
      %v667 = vmax.f32 %v635, 0.0
      %v668 = vmax.f32 %v636, 0.0
      %v669 = vmax.f32 %v637, 0.0
      %v670 = vmax.f32 %v638, 0.0
      %v671 = vmax.f32 %v639, 0.0
      %v672 = vmax.f32 %v640, 0.0
      %v673 = vmax.f32 %v641, 0.0
      %v674 = vmax.f32 %v642, 0.0
      %v675 = vmax.f32 %v643, 0.0
      %v676 = vmax.f32 %v644, 0.0
      %v677 = vmax.f32 %v645, 0.0
      %v678 = vmax.f32 %v646, 0.0
      %v679 = vmax.f32 %v647, 0.0
      %v680 = vmax.f32 %v648, 0.0
      %v681 = vmax.f32 %v649, 0.0
      %v682 = vmax.f32 %v650, 0.0
      %v683 = vmax.f32 %v651, 0.0
      %v684 = vmax.f32 %v652, 0.0
      %v685 = vmax.f32 %v653, 0.0
      %v686 = vmax.f32 %v654, 0.0
      %v687 = vmax.f32 %v655, 0.0
      %v688 = vmax.f32 %v656, 0.0
      %v689 = vmax.f32 %v657, 0.0
      %v690 = vmax.f32 %v658, 0.0
      %v691 = vmax.f32 %v659, 0.0
      %v692 = vmax.f32 %v660, 0.0
      %693 = vst [vmem:[%s248] sm:$0xff] %v661
      %694 = vst [vmem:[%s248 + $0x8] sm:$0xff] %v662
      %695 = vst [vmem:[%s248 + $0x10] sm:$0xff] %v663
      %696 = vst [vmem:[%s248 + $0x18] sm:$0xff] %v664
      %697 = vst [vmem:[%s248 + $0x20] sm:$0xff] %v665
      %698 = vst [vmem:[%s248 + $0x28] sm:$0xff] %v666
      %699 = vst [vmem:[%s248 + $0x30] sm:$0xff] %v667
      %700 = vst [vmem:[%s248 + $0x38] sm:$0xff] %v668
      %701 = vst [vmem:[%s248 + $0x40] sm:$0xff] %v669
      %702 = vst [vmem:[%s248 + $0x48] sm:$0xff] %v670
      %703 = vst [vmem:[%s248 + $0x50] sm:$0xff] %v671
      %704 = vst [vmem:[%s248 + $0x58] sm:$0xff] %v672
      %705 = vst [vmem:[%s248 + $0x60] sm:$0xff] %v673
      %706 = vst [vmem:[%s248 + $0x68] sm:$0xff] %v674
      %707 = vst [vmem:[%s248 + $0x70] sm:$0xff] %v675
      %708 = vst [vmem:[%s248 + $0x78] sm:$0xff] %v676
      %709 = vst [vmem:[%s248 + $0x80] sm:$0xff] %v677
      %710 = vst [vmem:[%s248 + $0x88] sm:$0xff] %v678
      %711 = vst [vmem:[%s248 + $0x90] sm:$0xff] %v679
      %712 = vst [vmem:[%s248 + $0x98] sm:$0xff] %v680
      %713 = vst [vmem:[%s248 + $0xa0] sm:$0xff] %v681
      %714 = vst [vmem:[%s248 + $0xa8] sm:$0xff] %v682
      %715 = vst [vmem:[%s248 + $0xb0] sm:$0xff] %v683
      %716 = vst [vmem:[%s248 + $0xb8] sm:$0xff] %v684
      %717 = vst [vmem:[%s248 + $0xc0] sm:$0xff] %v685
      %718 = vst [vmem:[%s248 + $0xc8] sm:$0xff] %v686
      %719 = vst [vmem:[%s248 + $0xd0] sm:$0xff] %v687
      %720 = vst [vmem:[%s248 + $0xd8] sm:$0xff] %v688
      %721 = vst [vmem:[%s248 + $0xe0] sm:$0xff] %v689
      %722 = vst [vmem:[%s248 + $0xe8] sm:$0xff] %v690
      %723 = vst [vmem:[%s248 + $0xf0] sm:$0xff] %v691
      %724 = vst [vmem:[%s248 + $0xf8] sm:$0xff] %v692
      %s725 = smul.u32 32, %s16
      %p726 = scmp.lt.s32.totalorder %s725, 63
      %s727 = scalar_select %p726, %s725, 63
      %s728 = smul.addr %s727, 8
      %s729 = scalar_lea.vmem %s5, %s728
      // Predicated region
      $region41: #{basic_block_forward.7} parent=39 // pred_check
        %p730 = pneg %p149
      $region42: #{basic_block_forward.7} parent=39 // pred_check_branch
        %732 = sbr.rel (%p730) target = $region44
      $region43: #{basic_block_forward.7} parent=39 // pred_region
        %s733 = smul.u32 32, %s16
      $region44: #{basic_block_forward.7} parent=39 // pred_fallthru
        _
    $region40: #{basic_block_forward.7} parent=5 // pred_fallthru
      _
    %p734 = scmp.le.s32.totalorder 2, %s11
    // Predicated region
    $region45: #{basic_block_forward.7} parent=5 // pred_check
      %p735 = pneg %p734
    $region46: #{basic_block_forward.7} parent=5 // pred_check_branch
      %737 = sbr.rel (%p735) target = $region48
    $region47: #{basic_block_forward.7} parent=5 // pred_region
      %s738 = ssub.s32 %s11, 2
      // Predicated region
      $region49: #{basic_block_forward.7} parent=47 // pred_check
        %p739 = pneg %p155
      $region50: #{basic_block_forward.7} parent=47 // pred_check_branch
        %741 = sbr.rel (%p739) target = $region52
      $region51: #{basic_block_forward.7} parent=47 // pred_region
        %s742 = smul.u32 32, %s17
        %p743 = scmp.lt.s32.totalorder %s742, 63
        %s744 = scalar_select %p743, %s742, 63
        %s745 = smul.addr %s744, 8
        %s746 = scalar_lea.vmem %s5, %s745
      $region52: #{basic_block_forward.7} parent=47 // pred_fallthru
        _
    $region48: #{basic_block_forward.7} parent=5 // pred_fallthru
      _
  $region6: #{basic_block_forward.7} parent=0 // loop_footer
    %s15 = sadd.s32 1, %s11
  $region7: #{basic_block_forward.7} parent=0 // loop_footer_branch
    %10 = sbr.rel target = $region3
  $region8: #{basic_block_forward.7} parent=0 // loop_exit
    _

</llo_original>
